<compile_context>
chip_gen: v7x
topology: tpu7x:2x2x1
jax: 0.10.0
libtpu: 0.0.40
codegen_flags: <defaults>
</compile_context>

<pallas_src>
import jax
import jax.numpy as jnp
import numpy as np
from jax.experimental import pallas as pl
from jax.experimental.pallas import tpu as pltpu

# Per-sample row counts (sequence padded 98 -> 99 so it stays divisible by 3):
#   conv1 in : 99 rows (valid 0..97, row 98 is zero pad)
#   pool1 out: 33 rows (valid 0..31)
#   pool2 out: 11 rows (valid 0..9)
#   conv3 out: valid rows 0..7  -> flatten 8*32 = 256 features
_LIN = 99   # padded input rows per sample
_LP1 = 33   # pool1 rows per sample
_LP2 = 11   # pool2 rows per sample


def _app_kernel(x_ref, w1_ref, b1_ref, w2_ref, b2_ref, w3_ref, b3_ref,
                wl1_ref, bl1_ref, wl2_ref, bl2_ref, out_ref, s1, s2, s3):
    f32 = jnp.float32
    tb = out_ref.shape[0]            # samples in this block

    L1 = _LIN * tb                   # rows of the x slab
    N1 = L1 - 2                      # conv1 output rows (== s1 rows)
    P1 = _LP1 * tb - 1               # pool1 output rows
    N2 = P1 - 2                      # conv2 output rows (== s2 rows)
    P2 = _LP2 * tb - 1               # pool2 output rows
    N3 = P2 - 2                      # conv3 output rows (== s3 rows)

    # --- Conv1d(2->32, k=3) + ReLU, batched: one K=6 matmul over the im2col'd
    #     slab (taps folded along channels in the wrapper). M = N1 ~ 99*tb. ---
    h = jnp.dot(x_ref[pl.ds(0, N1), :], w1_ref[...], preferred_element_type=f32)
    s1[...] = jnp.maximum(h + b1_ref[...], 0.0)

    # --- MaxPool1d(3): each sample occupies 99 rows (divisible by 3), so one
    #     global stride-3 read per tap pools every sample at once. ---
    p1 = jnp.maximum(
        jnp.maximum(s1[pl.ds(0, P1, stride=3), :],
                    s1[pl.ds(1, P1, stride=3), :]),
        s1[pl.ds(2, P1, stride=3), :])

    # --- Conv1d(32->32, k=3) + ReLU ---
    h = jnp.dot(p1[0:N2, :], w2_ref[0], preferred_element_type=f32)
    h = h + jnp.dot(p1[1:1 + N2, :], w2_ref[1], preferred_element_type=f32)
    h = h + jnp.dot(p1[2:2 + N2, :], w2_ref[2], preferred_element_type=f32)
    s2[...] = jnp.maximum(h + b2_ref[...], 0.0)

    # --- MaxPool1d(3) ---
    p2 = jnp.maximum(
        jnp.maximum(s2[pl.ds(0, P2, stride=3), :],
                    s2[pl.ds(1, P2, stride=3), :]),
        s2[pl.ds(2, P2, stride=3), :])

    # --- Conv1d(32->32, k=3) + ReLU ---
    h = jnp.dot(p2[0:N3, :], w3_ref[0], preferred_element_type=f32)
    h = h + jnp.dot(p2[1:1 + N3, :], w3_ref[1], preferred_element_type=f32)
    h = h + jnp.dot(p2[2:2 + N3, :], w3_ref[2], preferred_element_type=f32)
    s3[...] = jnp.maximum(h + b3_ref[...], 0.0)

    # --- Flatten + Linear(256->128): 8 per-position (tb,32)@(32,128) matmuls.
    #     wl1 is pre-laid out as [l, c, o] (matches torch flatten order c*8+l);
    #     a stride-11 read pulls row l of every sample in the block. ---
    y1 = jnp.dot(s3[pl.ds(0, tb, stride=_LP2), :], wl1_ref[0],
                 preferred_element_type=f32)
    for l in range(1, 8):
        xl = s3[pl.ds(l, tb, stride=_LP2), :]          # (tb, 32)
        y1 = y1 + jnp.dot(xl, wl1_ref[l], preferred_element_type=f32)
    y1 = y1 + bl1_ref[...]

    # --- Linear(128->8) ---
    out_ref[...] = (jnp.dot(y1, wl2_ref[...], preferred_element_type=f32)
                    + bl2_ref[...])


def pytorch_app_forward(x_ncw, params, tb=32):
    """x_ncw: (B, 2, 98) float32 in PyTorch NCW layout -> (B, 8) logits."""
    w1, b1, w2, b2, w3, b3, wl1, bl1, wl2, bl2 = params
    B = x_ncw.shape[0]

    if B <= tb:
        TB, B_pad = B, B                       # single block = full arrays
    else:
        TB = tb                                # multiple of 8
        B_pad = ((B + TB - 1) // TB) * TB
    grid = B_pad // TB

    # NCW -> NLC (channels on lanes), pad batch, pad L 98 -> 99, im2col the 3
    # conv1 taps onto the channel axis (2 -> 6), then flatten (batch, L) onto
    # the sublane axis so the kernel works on 2-D slabs.
    x = jnp.transpose(x_ncw, (0, 2, 1)).astype(jnp.float32)      # (B, 98, 2)
    x = jnp.pad(x, ((0, B_pad - B), (0, 1), (0, 0)))             # (B_pad, 99, 2)
    x6 = jnp.concatenate(
        [x,
         jnp.pad(x[:, 1:, :], ((0, 0), (0, 1), (0, 0))),
         jnp.pad(x[:, 2:, :], ((0, 0), (0, 2), (0, 0)))],
        axis=2)                                                  # (B_pad, 99, 6)
    x2d = x6.reshape(B_pad * _LIN, 6)

    # Conv1 weight folded to (6, 32) matching the [k, ci] tap order of x6.
    w1_6 = w1.reshape(6, 32)

    n1 = _LIN * TB - 2          # conv1 output rows per block
    n2 = _LP1 * TB - 3          # conv2 output rows per block
    n3 = _LP2 * TB - 3          # conv3 output rows per block

    flops = 350_000 * B_pad
    bytes_accessed = B_pad * (99 * 6 + 8) * 4 + 180_000

    out = pl.pallas_call(
        _app_kernel,
        out_shape=jax.ShapeDtypeStruct((B_pad, 8), jnp.float32),
        grid_spec=pltpu.PrefetchScalarGridSpec(
            num_scalar_prefetch=0,
            grid=(grid,),
            in_specs=[
                pl.BlockSpec((TB * _LIN, 6), lambda b: (b, 0)),    # x slab (im2col)
                pl.BlockSpec((6, 32), lambda b: (0, 0)),           # w1 [k*ci, co]
                pl.BlockSpec((1, 32), lambda b: (0, 0)),           # b1
                pl.BlockSpec((3, 32, 32), lambda b: (0, 0, 0)),    # w2 [k,ci,co]
                pl.BlockSpec((1, 32), lambda b: (0, 0)),           # b2
                pl.BlockSpec((3, 32, 32), lambda b: (0, 0, 0)),    # w3
                pl.BlockSpec((1, 32), lambda b: (0, 0)),           # b3
                pl.BlockSpec((8, 32, 128), lambda b: (0, 0, 0)),   # wl1 [l,c,o]
                pl.BlockSpec((1, 128), lambda b: (0, 0)),          # bl1
                pl.BlockSpec((128, 8), lambda b: (0, 0)),          # wl2 [i,o]
                pl.BlockSpec((1, 8), lambda b: (0, 0)),            # bl2
            ],
            out_specs=pl.BlockSpec((TB, 8), lambda b: (b, 0)),
            scratch_shapes=[
                pltpu.VMEM((n1, 32), jnp.float32),   # conv1 + relu
                pltpu.VMEM((n2, 32), jnp.float32),   # conv2 + relu
                pltpu.VMEM((n3, 32), jnp.float32),   # conv3 + relu
            ],
        ),
        compiler_params=pltpu.CompilerParams(
            dimension_semantics=("parallel",)),
        cost_estimate=pl.CostEstimate(flops=flops, transcendentals=0,
                                      bytes_accessed=bytes_accessed),
    )(x2d, w1_6, b1, w2, b2, w3, b3, wl1, bl1, wl2, bl2)
    return out[:B]


def ref_forward(x_ncw, params):
    """Pure-JAX reference (same math as the PyTorch module), high precision."""
    w1, b1, w2, b2, w3, b3, wl1, bl1, wl2, bl2 = params
    hp = jax.lax.Precision.HIGHEST
    x = jnp.transpose(x_ncw, (0, 2, 1)).astype(jnp.float32)      # (B, L, C)

    def conv_relu(h, w, b, l_out):
        acc = jnp.zeros((h.shape[0], l_out, w.shape[2]), jnp.float32) + b[None]
        for k in range(3):
            acc = acc + jnp.einsum('blc,cd->bld', h[:, k:k + l_out, :], w[k],
                                   precision=hp)
        return jnp.maximum(acc, 0.0)

    def pool3(h):
        B, L, C = h.shape
        P = L // 3
        return jnp.max(h[:, :P * 3, :].reshape(B, P, 3, C), axis=2)

    h = conv_relu(x, w1, b1, 96)
    h = pool3(h)
    h = conv_relu(h, w2, b2, 30)
    h = pool3(h)
    h = conv_relu(h, w3, b3, 8)                                   # (B, 8, 32)
    y = jnp.einsum('blc,lco->bo', h, wl1, precision=hp) + bl1     # (B, 128)
    y = jnp.dot(y, wl2, precision=hp) + bl2                       # (B, 8)
    return y


def init_params():
    key = jax.random.PRNGKey(0)
    ks = jax.random.split(key, 10)

    def rnd(k, shape, scale):
        return (scale * jax.random.normal(k, shape)).astype(jnp.float32)

    # PyTorch parameter shapes
    w1_t = rnd(ks[0], (32, 2, 3), 0.2)     # Conv1d(2, 32, 3).weight
    b1_t = rnd(ks[1], (32,), 0.1)
    w2_t = rnd(ks[2], (32, 32, 3), 0.1)    # Conv1d(32, 32, 3).weight
    b2_t = rnd(ks[3], (32,), 0.1)
    w3_t = rnd(ks[4], (32, 32, 3), 0.1)    # Conv1d(32, 32, 3).weight
    b3_t = rnd(ks[5], (32,), 0.1)
    wl1_t = rnd(ks[6], (128, 256), 0.05)   # Linear(256, 128).weight
    bl1_t = rnd(ks[7], (128,), 0.05)
    wl2_t = rnd(ks[8], (8, 128), 0.05)     # Linear(128, 8).weight
    bl2_t = rnd(ks[9], (8,), 0.05)

    # Kernel-friendly layouts
    w1 = jnp.transpose(w1_t, (2, 1, 0))    # (3, 2, 32)   [k, cin, cout]
    w2 = jnp.transpose(w2_t, (2, 1, 0))    # (3, 32, 32)
    w3 = jnp.transpose(w3_t, (2, 1, 0))    # (3, 32, 32)
    b1, b2, b3 = b1_t[None], b2_t[None], b3_t[None]
    # Linear1 weight -> [l, c, o] matching torch flatten order flat[c*8 + l]
    wl1 = jnp.transpose(wl1_t.reshape(128, 32, 8), (2, 1, 0))  # (8, 32, 128)
    bl1 = bl1_t[None]
    wl2 = jnp.transpose(wl2_t, (1, 0))     # (128, 8)
    bl2 = bl2_t[None]
    return (w1, b1, w2, b2, w3, b3, wl1, bl1, wl2, bl2)


if __name__ == "__main__":
    params = init_params()

    # Small deterministic test (batch=2) plus a multi-block run that exercises
    # the batched grid (TB=32, batch padding, 3 grid steps).
    for B in (2, 80):
        x = jax.random.normal(jax.random.PRNGKey(0), (B, 2, 98),
                              dtype=jnp.float32)                 # PyTorch NCW
        out = jax.block_until_ready(pytorch_app_forward(x, params))
        ref = ref_forward(x, params)
        np.testing.assert_allclose(np.asarray(out), np.asarray(ref),
                                   rtol=1e-4, atol=1e-4)
    print("KERNEL_OK")
</pallas_src>

<mosaic_0001>
module attributes {stable_mosaic.version = 11 : i64} {
  func.func @_app_kernel(%arg0: i32, %arg1: memref<198x6xf32, #tpu.memory_space<vmem>>, %arg2: memref<6x32xf32, #tpu.memory_space<vmem>>, %arg3: memref<1x32xf32, #tpu.memory_space<vmem>>, %arg4: memref<3x32x32xf32, #tpu.memory_space<vmem>>, %arg5: memref<1x32xf32, #tpu.memory_space<vmem>>, %arg6: memref<3x32x32xf32, #tpu.memory_space<vmem>>, %arg7: memref<1x32xf32, #tpu.memory_space<vmem>>, %arg8: memref<8x32x128xf32, #tpu.memory_space<vmem>>, %arg9: memref<1x128xf32, #tpu.memory_space<vmem>>, %arg10: memref<128x8xf32, #tpu.memory_space<vmem>>, %arg11: memref<1x8xf32, #tpu.memory_space<vmem>>, %arg12: memref<2x8xf32, #tpu.memory_space<vmem>>, %arg13: memref<196x32xf32, #tpu.memory_space<vmem>>, %arg14: memref<63x32xf32, #tpu.memory_space<vmem>>, %arg15: memref<19x32xf32, #tpu.memory_space<vmem>>) attributes {dimension_semantics = [#tpu.dimension_semantics<parallel>], iteration_bounds = array<i64: 1>, scalar_prefetch = 0 : i64, scratch_operands = 3 : i64, tpu.core_type = #tpu.core_type<tc>, window_params = [{transform_indices = @transform_0, window_bounds = array<i64: 198, 6>}, {pipeline_mode = #tpu.pipeline_mode<synchronous>, transform_indices = @transform_1, window_bounds = array<i64: 6, 32>}, {pipeline_mode = #tpu.pipeline_mode<synchronous>, transform_indices = @transform_2, window_bounds = array<i64: 1, 32>}, {pipeline_mode = #tpu.pipeline_mode<synchronous>, transform_indices = @transform_3, window_bounds = array<i64: 3, 32, 32>}, {pipeline_mode = #tpu.pipeline_mode<synchronous>, transform_indices = @transform_4, window_bounds = array<i64: 1, 32>}, {pipeline_mode = #tpu.pipeline_mode<synchronous>, transform_indices = @transform_5, window_bounds = array<i64: 3, 32, 32>}, {pipeline_mode = #tpu.pipeline_mode<synchronous>, transform_indices = @transform_6, window_bounds = array<i64: 1, 32>}, {pipeline_mode = #tpu.pipeline_mode<synchronous>, transform_indices = @transform_7, window_bounds = array<i64: 8, 32, 128>}, {pipeline_mode = #tpu.pipeline_mode<synchronous>, transform_indices = @transform_8, window_bounds = array<i64: 1, 128>}, {pipeline_mode = #tpu.pipeline_mode<synchronous>, transform_indices = @transform_9, window_bounds = array<i64: 128, 8>}, {pipeline_mode = #tpu.pipeline_mode<synchronous>, transform_indices = @transform_10, window_bounds = array<i64: 1, 8>}, {transform_indices = @transform_11, window_bounds = array<i64: 2, 8>}]} {
    %c0 = arith.constant 0 : index
    %c0_0 = arith.constant 0 : index
    %0 = vector.load %arg1[%c0, %c0_0] : memref<198x6xf32, #tpu.memory_space<vmem>>, vector<196x6xf32>
    %c0_1 = arith.constant 0 : index
    %c0_2 = arith.constant 0 : index
    %1 = vector.load %arg2[%c0_1, %c0_2] : memref<6x32xf32, #tpu.memory_space<vmem>>, vector<6x32xf32>
    %cst = arith.constant dense<0.000000e+00> : vector<196x32xf32>
    %2 = tpu.matmul %0, %1, %cst {dimension_numbers = #tpu.dot_dimension_numbers<[1], [0], [0], [1], [0, 0, 1, 1], [], []>} : vector<196x6xf32>, vector<6x32xf32>, vector<196x32xf32> -> vector<196x32xf32>
    %c0_3 = arith.constant 0 : index
    %c0_4 = arith.constant 0 : index
    %3 = vector.load %arg3[%c0_3, %c0_4] : memref<1x32xf32, #tpu.memory_space<vmem>>, vector<1x32xf32>
    %4 = vector.broadcast %3 : vector<1x32xf32> to vector<196x32xf32>
    %5 = arith.addf %2, %4 : vector<196x32xf32>
    %cst_5 = arith.constant 0.000000e+00 : f32
    %6 = vector.broadcast %cst_5 : f32 to vector<196x32xf32>
    %7 = arith.maximumf %5, %6 : vector<196x32xf32>
    %c0_6 = arith.constant 0 : index
    %c0_7 = arith.constant 0 : index
    %8 = vector.load %arg13[%c0_6, %c0_7] : memref<196x32xf32, #tpu.memory_space<vmem>>, vector<196x32xf32>
    tpu.vector_store %arg13[%c0_6, %c0_7], %7 {strides = array<i32>} : memref<196x32xf32, #tpu.memory_space<vmem>>, vector<196x32xf32>,
    %c0_8 = arith.constant 0 : index
    %c0_9 = arith.constant 0 : index
    %9 = tpu.strided_load %arg13[%c0_8, %c0_9] {strides = array<i32: 3, 1>} : memref<196x32xf32, #tpu.memory_space<vmem>>, vector<65x32xf32>
    %c1 = arith.constant 1 : index
    %c0_10 = arith.constant 0 : index
    %10 = tpu.strided_load %arg13[%c1, %c0_10] {strides = array<i32: 3, 1>} : memref<196x32xf32, #tpu.memory_space<vmem>>, vector<65x32xf32>
    %11 = arith.maximumf %9, %10 : vector<65x32xf32>
    %c2 = arith.constant 2 : index
    %c0_11 = arith.constant 0 : index
    %12 = tpu.strided_load %arg13[%c2, %c0_11] {strides = array<i32: 3, 1>} : memref<196x32xf32, #tpu.memory_space<vmem>>, vector<65x32xf32>
    %13 = arith.maximumf %11, %12 : vector<65x32xf32>
    %14 = vector.extract_strided_slice %13 {offsets = [0, 0], sizes = [63, 32], strides = [1, 1]} : vector<65x32xf32> to vector<63x32xf32>
    %c0_12 = arith.constant 0 : index
    %c0_13 = arith.constant 0 : index
    %c0_14 = arith.constant 0 : index
    %15 = vector.load %arg4[%c0_12, %c0_13, %c0_14] : memref<3x32x32xf32, #tpu.memory_space<vmem>>, vector<1x32x32xf32>
    %16 = vector.shape_cast %15 : vector<1x32x32xf32> to vector<32x32xf32>
    %cst_15 = arith.constant dense<0.000000e+00> : vector<63x32xf32>
    %17 = tpu.matmul %14, %16, %cst_15 {dimension_numbers = #tpu.dot_dimension_numbers<[1], [0], [0], [1], [0, 0, 1, 1], [], []>} : vector<63x32xf32>, vector<32x32xf32>, vector<63x32xf32> -> vector<63x32xf32>
    %18 = vector.extract_strided_slice %13 {offsets = [1, 0], sizes = [63, 32], strides = [1, 1]} : vector<65x32xf32> to vector<63x32xf32>
    %c1_16 = arith.constant 1 : index
    %c0_17 = arith.constant 0 : index
    %c0_18 = arith.constant 0 : index
    %19 = vector.load %arg4[%c1_16, %c0_17, %c0_18] : memref<3x32x32xf32, #tpu.memory_space<vmem>>, vector<1x32x32xf32>
    %20 = vector.shape_cast %19 : vector<1x32x32xf32> to vector<32x32xf32>
    %cst_19 = arith.constant dense<0.000000e+00> : vector<63x32xf32>
    %21 = tpu.matmul %18, %20, %cst_19 {dimension_numbers = #tpu.dot_dimension_numbers<[1], [0], [0], [1], [0, 0, 1, 1], [], []>} : vector<63x32xf32>, vector<32x32xf32>, vector<63x32xf32> -> vector<63x32xf32>
    %22 = arith.addf %17, %21 : vector<63x32xf32>
    %23 = vector.extract_strided_slice %13 {offsets = [2, 0], sizes = [63, 32], strides = [1, 1]} : vector<65x32xf32> to vector<63x32xf32>
    %c2_20 = arith.constant 2 : index
    %c0_21 = arith.constant 0 : index
    %c0_22 = arith.constant 0 : index
    %24 = vector.load %arg4[%c2_20, %c0_21, %c0_22] : memref<3x32x32xf32, #tpu.memory_space<vmem>>, vector<1x32x32xf32>
    %25 = vector.shape_cast %24 : vector<1x32x32xf32> to vector<32x32xf32>
    %cst_23 = arith.constant dense<0.000000e+00> : vector<63x32xf32>
    %26 = tpu.matmul %23, %25, %cst_23 {dimension_numbers = #tpu.dot_dimension_numbers<[1], [0], [0], [1], [0, 0, 1, 1], [], []>} : vector<63x32xf32>, vector<32x32xf32>, vector<63x32xf32> -> vector<63x32xf32>
    %27 = arith.addf %22, %26 : vector<63x32xf32>
    %c0_24 = arith.constant 0 : index
    %c0_25 = arith.constant 0 : index
    %28 = vector.load %arg5[%c0_24, %c0_25] : memref<1x32xf32, #tpu.memory_space<vmem>>, vector<1x32xf32>
    %29 = vector.broadcast %28 : vector<1x32xf32> to vector<63x32xf32>
    %30 = arith.addf %27, %29 : vector<63x32xf32>
    %cst_26 = arith.constant 0.000000e+00 : f32
    %31 = vector.broadcast %cst_26 : f32 to vector<63x32xf32>
    %32 = arith.maximumf %30, %31 : vector<63x32xf32>
    %c0_27 = arith.constant 0 : index
    %c0_28 = arith.constant 0 : index
    %33 = vector.load %arg14[%c0_27, %c0_28] : memref<63x32xf32, #tpu.memory_space<vmem>>, vector<63x32xf32>
    tpu.vector_store %arg14[%c0_27, %c0_28], %32 {strides = array<i32>} : memref<63x32xf32, #tpu.memory_space<vmem>>, vector<63x32xf32>,
    %c0_29 = arith.constant 0 : index
    %c0_30 = arith.constant 0 : index
    %34 = tpu.strided_load %arg14[%c0_29, %c0_30] {strides = array<i32: 3, 1>} : memref<63x32xf32, #tpu.memory_space<vmem>>, vector<21x32xf32>
    %c1_31 = arith.constant 1 : index
    %c0_32 = arith.constant 0 : index
    %35 = tpu.strided_load %arg14[%c1_31, %c0_32] {strides = array<i32: 3, 1>} : memref<63x32xf32, #tpu.memory_space<vmem>>, vector<21x32xf32>
    %36 = arith.maximumf %34, %35 : vector<21x32xf32>
    %c2_33 = arith.constant 2 : index
    %c0_34 = arith.constant 0 : index
    %37 = tpu.strided_load %arg14[%c2_33, %c0_34] {strides = array<i32: 3, 1>} : memref<63x32xf32, #tpu.memory_space<vmem>>, vector<21x32xf32>
    %38 = arith.maximumf %36, %37 : vector<21x32xf32>
    %39 = vector.extract_strided_slice %38 {offsets = [0, 0], sizes = [19, 32], strides = [1, 1]} : vector<21x32xf32> to vector<19x32xf32>
    %c0_35 = arith.constant 0 : index
    %c0_36 = arith.constant 0 : index
    %c0_37 = arith.constant 0 : index
    %40 = vector.load %arg6[%c0_35, %c0_36, %c0_37] : memref<3x32x32xf32, #tpu.memory_space<vmem>>, vector<1x32x32xf32>
    %41 = vector.shape_cast %40 : vector<1x32x32xf32> to vector<32x32xf32>
    %cst_38 = arith.constant dense<0.000000e+00> : vector<19x32xf32>
    %42 = tpu.matmul %39, %41, %cst_38 {dimension_numbers = #tpu.dot_dimension_numbers<[1], [0], [0], [1], [0, 0, 1, 1], [], []>} : vector<19x32xf32>, vector<32x32xf32>, vector<19x32xf32> -> vector<19x32xf32>
    %43 = vector.extract_strided_slice %38 {offsets = [1, 0], sizes = [19, 32], strides = [1, 1]} : vector<21x32xf32> to vector<19x32xf32>
    %c1_39 = arith.constant 1 : index
    %c0_40 = arith.constant 0 : index
    %c0_41 = arith.constant 0 : index
    %44 = vector.load %arg6[%c1_39, %c0_40, %c0_41] : memref<3x32x32xf32, #tpu.memory_space<vmem>>, vector<1x32x32xf32>
    %45 = vector.shape_cast %44 : vector<1x32x32xf32> to vector<32x32xf32>
    %cst_42 = arith.constant dense<0.000000e+00> : vector<19x32xf32>
    %46 = tpu.matmul %43, %45, %cst_42 {dimension_numbers = #tpu.dot_dimension_numbers<[1], [0], [0], [1], [0, 0, 1, 1], [], []>} : vector<19x32xf32>, vector<32x32xf32>, vector<19x32xf32> -> vector<19x32xf32>
    %47 = arith.addf %42, %46 : vector<19x32xf32>
    %48 = vector.extract_strided_slice %38 {offsets = [2, 0], sizes = [19, 32], strides = [1, 1]} : vector<21x32xf32> to vector<19x32xf32>
    %c2_43 = arith.constant 2 : index
    %c0_44 = arith.constant 0 : index
    %c0_45 = arith.constant 0 : index
    %49 = vector.load %arg6[%c2_43, %c0_44, %c0_45] : memref<3x32x32xf32, #tpu.memory_space<vmem>>, vector<1x32x32xf32>
    %50 = vector.shape_cast %49 : vector<1x32x32xf32> to vector<32x32xf32>
    %cst_46 = arith.constant dense<0.000000e+00> : vector<19x32xf32>
    %51 = tpu.matmul %48, %50, %cst_46 {dimension_numbers = #tpu.dot_dimension_numbers<[1], [0], [0], [1], [0, 0, 1, 1], [], []>} : vector<19x32xf32>, vector<32x32xf32>, vector<19x32xf32> -> vector<19x32xf32>
    %52 = arith.addf %47, %51 : vector<19x32xf32>
    %c0_47 = arith.constant 0 : index
    %c0_48 = arith.constant 0 : index
    %53 = vector.load %arg7[%c0_47, %c0_48] : memref<1x32xf32, #tpu.memory_space<vmem>>, vector<1x32xf32>
    %54 = vector.broadcast %53 : vector<1x32xf32> to vector<19x32xf32>
    %55 = arith.addf %52, %54 : vector<19x32xf32>
    %cst_49 = arith.constant 0.000000e+00 : f32
    %56 = vector.broadcast %cst_49 : f32 to vector<19x32xf32>
    %57 = arith.maximumf %55, %56 : vector<19x32xf32>
    %c0_50 = arith.constant 0 : index
    %c0_51 = arith.constant 0 : index
    %58 = vector.load %arg15[%c0_50, %c0_51] : memref<19x32xf32, #tpu.memory_space<vmem>>, vector<19x32xf32>
    tpu.vector_store %arg15[%c0_50, %c0_51], %57 {strides = array<i32>} : memref<19x32xf32, #tpu.memory_space<vmem>>, vector<19x32xf32>,
    %c0_52 = arith.constant 0 : index
    %c0_53 = arith.constant 0 : index
    %59 = tpu.strided_load %arg15[%c0_52, %c0_53] {strides = array<i32: 11, 1>} : memref<19x32xf32, #tpu.memory_space<vmem>>, vector<2x32xf32>
    %c0_54 = arith.constant 0 : index
    %c0_55 = arith.constant 0 : index
    %c0_56 = arith.constant 0 : index
    %60 = vector.load %arg8[%c0_54, %c0_55, %c0_56] : memref<8x32x128xf32, #tpu.memory_space<vmem>>, vector<1x32x128xf32>
    %61 = vector.shape_cast %60 : vector<1x32x128xf32> to vector<32x128xf32>
    %cst_57 = arith.constant dense<0.000000e+00> : vector<2x128xf32>
    %62 = tpu.matmul %59, %61, %cst_57 {dimension_numbers = #tpu.dot_dimension_numbers<[1], [0], [0], [1], [0, 0, 1, 1], [], []>} : vector<2x32xf32>, vector<32x128xf32>, vector<2x128xf32> -> vector<2x128xf32>
    %c1_58 = arith.constant 1 : index
    %c0_59 = arith.constant 0 : index
    %63 = tpu.strided_load %arg15[%c1_58, %c0_59] {strides = array<i32: 11, 1>} : memref<19x32xf32, #tpu.memory_space<vmem>>, vector<2x32xf32>
    %c1_60 = arith.constant 1 : index
    %c0_61 = arith.constant 0 : index
    %c0_62 = arith.constant 0 : index
    %64 = vector.load %arg8[%c1_60, %c0_61, %c0_62] : memref<8x32x128xf32, #tpu.memory_space<vmem>>, vector<1x32x128xf32>
    %65 = vector.shape_cast %64 : vector<1x32x128xf32> to vector<32x128xf32>
    %cst_63 = arith.constant dense<0.000000e+00> : vector<2x128xf32>
    %66 = tpu.matmul %63, %65, %cst_63 {dimension_numbers = #tpu.dot_dimension_numbers<[1], [0], [0], [1], [0, 0, 1, 1], [], []>} : vector<2x32xf32>, vector<32x128xf32>, vector<2x128xf32> -> vector<2x128xf32>
    %67 = arith.addf %62, %66 : vector<2x128xf32>
    %c2_64 = arith.constant 2 : index
    %c0_65 = arith.constant 0 : index
    %68 = tpu.strided_load %arg15[%c2_64, %c0_65] {strides = array<i32: 11, 1>} : memref<19x32xf32, #tpu.memory_space<vmem>>, vector<2x32xf32>
    %c2_66 = arith.constant 2 : index
    %c0_67 = arith.constant 0 : index
    %c0_68 = arith.constant 0 : index
    %69 = vector.load %arg8[%c2_66, %c0_67, %c0_68] : memref<8x32x128xf32, #tpu.memory_space<vmem>>, vector<1x32x128xf32>
    %70 = vector.shape_cast %69 : vector<1x32x128xf32> to vector<32x128xf32>
    %cst_69 = arith.constant dense<0.000000e+00> : vector<2x128xf32>
    %71 = tpu.matmul %68, %70, %cst_69 {dimension_numbers = #tpu.dot_dimension_numbers<[1], [0], [0], [1], [0, 0, 1, 1], [], []>} : vector<2x32xf32>, vector<32x128xf32>, vector<2x128xf32> -> vector<2x128xf32>
    %72 = arith.addf %67, %71 : vector<2x128xf32>
    %c3 = arith.constant 3 : index
    %c0_70 = arith.constant 0 : index
    %73 = tpu.strided_load %arg15[%c3, %c0_70] {strides = array<i32: 11, 1>} : memref<19x32xf32, #tpu.memory_space<vmem>>, vector<2x32xf32>
    %c3_71 = arith.constant 3 : index
    %c0_72 = arith.constant 0 : index
    %c0_73 = arith.constant 0 : index
    %74 = vector.load %arg8[%c3_71, %c0_72, %c0_73] : memref<8x32x128xf32, #tpu.memory_space<vmem>>, vector<1x32x128xf32>
    %75 = vector.shape_cast %74 : vector<1x32x128xf32> to vector<32x128xf32>
    %cst_74 = arith.constant dense<0.000000e+00> : vector<2x128xf32>
    %76 = tpu.matmul %73, %75, %cst_74 {dimension_numbers = #tpu.dot_dimension_numbers<[1], [0], [0], [1], [0, 0, 1, 1], [], []>} : vector<2x32xf32>, vector<32x128xf32>, vector<2x128xf32> -> vector<2x128xf32>
    %77 = arith.addf %72, %76 : vector<2x128xf32>
    %c4 = arith.constant 4 : index
    %c0_75 = arith.constant 0 : index
    %78 = tpu.strided_load %arg15[%c4, %c0_75] {strides = array<i32: 11, 1>} : memref<19x32xf32, #tpu.memory_space<vmem>>, vector<2x32xf32>
    %c4_76 = arith.constant 4 : index
    %c0_77 = arith.constant 0 : index
    %c0_78 = arith.constant 0 : index
    %79 = vector.load %arg8[%c4_76, %c0_77, %c0_78] : memref<8x32x128xf32, #tpu.memory_space<vmem>>, vector<1x32x128xf32>
    %80 = vector.shape_cast %79 : vector<1x32x128xf32> to vector<32x128xf32>
    %cst_79 = arith.constant dense<0.000000e+00> : vector<2x128xf32>
    %81 = tpu.matmul %78, %80, %cst_79 {dimension_numbers = #tpu.dot_dimension_numbers<[1], [0], [0], [1], [0, 0, 1, 1], [], []>} : vector<2x32xf32>, vector<32x128xf32>, vector<2x128xf32> -> vector<2x128xf32>
    %82 = arith.addf %77, %81 : vector<2x128xf32>
    %c5 = arith.constant 5 : index
    %c0_80 = arith.constant 0 : index
    %83 = tpu.strided_load %arg15[%c5, %c0_80] {strides = array<i32: 11, 1>} : memref<19x32xf32, #tpu.memory_space<vmem>>, vector<2x32xf32>
    %c5_81 = arith.constant 5 : index
    %c0_82 = arith.constant 0 : index
    %c0_83 = arith.constant 0 : index
    %84 = vector.load %arg8[%c5_81, %c0_82, %c0_83] : memref<8x32x128xf32, #tpu.memory_space<vmem>>, vector<1x32x128xf32>
    %85 = vector.shape_cast %84 : vector<1x32x128xf32> to vector<32x128xf32>
    %cst_84 = arith.constant dense<0.000000e+00> : vector<2x128xf32>
    %86 = tpu.matmul %83, %85, %cst_84 {dimension_numbers = #tpu.dot_dimension_numbers<[1], [0], [0], [1], [0, 0, 1, 1], [], []>} : vector<2x32xf32>, vector<32x128xf32>, vector<2x128xf32> -> vector<2x128xf32>
    %87 = arith.addf %82, %86 : vector<2x128xf32>
    %c6 = arith.constant 6 : index
    %c0_85 = arith.constant 0 : index
    %88 = tpu.strided_load %arg15[%c6, %c0_85] {strides = array<i32: 11, 1>} : memref<19x32xf32, #tpu.memory_space<vmem>>, vector<2x32xf32>
    %c6_86 = arith.constant 6 : index
    %c0_87 = arith.constant 0 : index
    %c0_88 = arith.constant 0 : index
    %89 = vector.load %arg8[%c6_86, %c0_87, %c0_88] : memref<8x32x128xf32, #tpu.memory_space<vmem>>, vector<1x32x128xf32>
    %90 = vector.shape_cast %89 : vector<1x32x128xf32> to vector<32x128xf32>
    %cst_89 = arith.constant dense<0.000000e+00> : vector<2x128xf32>
    %91 = tpu.matmul %88, %90, %cst_89 {dimension_numbers = #tpu.dot_dimension_numbers<[1], [0], [0], [1], [0, 0, 1, 1], [], []>} : vector<2x32xf32>, vector<32x128xf32>, vector<2x128xf32> -> vector<2x128xf32>
    %92 = arith.addf %87, %91 : vector<2x128xf32>
    %c7 = arith.constant 7 : index
    %c0_90 = arith.constant 0 : index
    %93 = tpu.strided_load %arg15[%c7, %c0_90] {strides = array<i32: 11, 1>} : memref<19x32xf32, #tpu.memory_space<vmem>>, vector<2x32xf32>
    %c7_91 = arith.constant 7 : index
    %c0_92 = arith.constant 0 : index
    %c0_93 = arith.constant 0 : index
    %94 = vector.load %arg8[%c7_91, %c0_92, %c0_93] : memref<8x32x128xf32, #tpu.memory_space<vmem>>, vector<1x32x128xf32>
    %95 = vector.shape_cast %94 : vector<1x32x128xf32> to vector<32x128xf32>
    %cst_94 = arith.constant dense<0.000000e+00> : vector<2x128xf32>
    %96 = tpu.matmul %93, %95, %cst_94 {dimension_numbers = #tpu.dot_dimension_numbers<[1], [0], [0], [1], [0, 0, 1, 1], [], []>} : vector<2x32xf32>, vector<32x128xf32>, vector<2x128xf32> -> vector<2x128xf32>
    %97 = arith.addf %92, %96 : vector<2x128xf32>
    %c0_95 = arith.constant 0 : index
    %c0_96 = arith.constant 0 : index
    %98 = vector.load %arg9[%c0_95, %c0_96] : memref<1x128xf32, #tpu.memory_space<vmem>>, vector<1x128xf32>
    %99 = vector.broadcast %98 : vector<1x128xf32> to vector<2x128xf32>
    %100 = arith.addf %97, %99 : vector<2x128xf32>
    %c0_97 = arith.constant 0 : index
    %c0_98 = arith.constant 0 : index
    %101 = vector.load %arg10[%c0_97, %c0_98] : memref<128x8xf32, #tpu.memory_space<vmem>>, vector<128x8xf32>
    %cst_99 = arith.constant dense<0.000000e+00> : vector<2x8xf32>
    %102 = tpu.matmul %100, %101, %cst_99 {dimension_numbers = #tpu.dot_dimension_numbers<[1], [0], [0], [1], [0, 0, 1, 1], [], []>} : vector<2x128xf32>, vector<128x8xf32>, vector<2x8xf32> -> vector<2x8xf32>
    %c0_100 = arith.constant 0 : index
    %c0_101 = arith.constant 0 : index
    %103 = vector.load %arg11[%c0_100, %c0_101] : memref<1x8xf32, #tpu.memory_space<vmem>>, vector<1x8xf32>
    %104 = vector.broadcast %103 : vector<1x8xf32> to vector<2x8xf32>
    %105 = arith.addf %102, %104 : vector<2x8xf32>
    %c0_102 = arith.constant 0 : index
    %c0_103 = arith.constant 0 : index
    %106 = vector.load %arg12[%c0_102, %c0_103] : memref<2x8xf32, #tpu.memory_space<vmem>>, vector<2x8xf32>
    tpu.vector_store %arg12[%c0_102, %c0_103], %105 {strides = array<i32>} : memref<2x8xf32, #tpu.memory_space<vmem>>, vector<2x8xf32>,
    return
  }
  func.func @transform_0(%arg0: i32) -> (i32, i32) {
    %c0_i32 = arith.constant 0 : i32
    %c0_i32_0 = arith.constant 0 : i32
    return %arg0, %c0_i32 : i32, i32
  }
  func.func @transform_1(%arg0: i32) -> (i32, i32) {
    %c0_i32 = arith.constant 0 : i32
    %c0_i32_0 = arith.constant 0 : i32
    %c0_i32_1 = arith.constant 0 : i32
    return %c0_i32, %c0_i32_0 : i32, i32
  }
  func.func @transform_2(%arg0: i32) -> (i32, i32) {
    %c0_i32 = arith.constant 0 : i32
    %c0_i32_0 = arith.constant 0 : i32
    %c0_i32_1 = arith.constant 0 : i32
    return %c0_i32, %c0_i32_0 : i32, i32
  }
  func.func @transform_3(%arg0: i32) -> (i32, i32, i32) {
    %c0_i32 = arith.constant 0 : i32
    %c0_i32_0 = arith.constant 0 : i32
    %c0_i32_1 = arith.constant 0 : i32
    %c0_i32_2 = arith.constant 0 : i32
    return %c0_i32, %c0_i32_0, %c0_i32_1 : i32, i32, i32
  }
  func.func @transform_4(%arg0: i32) -> (i32, i32) {
    %c0_i32 = arith.constant 0 : i32
    %c0_i32_0 = arith.constant 0 : i32
    %c0_i32_1 = arith.constant 0 : i32
    return %c0_i32, %c0_i32_0 : i32, i32
  }
  func.func @transform_5(%arg0: i32) -> (i32, i32, i32) {
    %c0_i32 = arith.constant 0 : i32
    %c0_i32_0 = arith.constant 0 : i32
    %c0_i32_1 = arith.constant 0 : i32
    %c0_i32_2 = arith.constant 0 : i32
    return %c0_i32, %c0_i32_0, %c0_i32_1 : i32, i32, i32
  }
  func.func @transform_6(%arg0: i32) -> (i32, i32) {
    %c0_i32 = arith.constant 0 : i32
    %c0_i32_0 = arith.constant 0 : i32
    %c0_i32_1 = arith.constant 0 : i32
    return %c0_i32, %c0_i32_0 : i32, i32
  }
  func.func @transform_7(%arg0: i32) -> (i32, i32, i32) {
    %c0_i32 = arith.constant 0 : i32
    %c0_i32_0 = arith.constant 0 : i32
    %c0_i32_1 = arith.constant 0 : i32
    %c0_i32_2 = arith.constant 0 : i32
    return %c0_i32, %c0_i32_0, %c0_i32_1 : i32, i32, i32
  }
  func.func @transform_8(%arg0: i32) -> (i32, i32) {
    %c0_i32 = arith.constant 0 : i32
    %c0_i32_0 = arith.constant 0 : i32
    %c0_i32_1 = arith.constant 0 : i32
    return %c0_i32, %c0_i32_0 : i32, i32
  }
  func.func @transform_9(%arg0: i32) -> (i32, i32) {
    %c0_i32 = arith.constant 0 : i32
    %c0_i32_0 = arith.constant 0 : i32
    %c0_i32_1 = arith.constant 0 : i32
    return %c0_i32, %c0_i32_0 : i32, i32
  }
  func.func @transform_10(%arg0: i32) -> (i32, i32) {
    %c0_i32 = arith.constant 0 : i32
    %c0_i32_0 = arith.constant 0 : i32
    %c0_i32_1 = arith.constant 0 : i32
    return %c0_i32, %c0_i32_0 : i32, i32
  }
  func.func @transform_11(%arg0: i32) -> (i32, i32) {
    %c0_i32 = arith.constant 0 : i32
    %c0_i32_0 = arith.constant 0 : i32
    return %arg0, %c0_i32 : i32, i32
  }
}

</mosaic_0001>

<llo_original>
// kernel: tpu_custom_call.1
$region0: #{tpu_custom_call.1}
  #allocation0 [shape = 'u32[]', space=smem, size = 0x4, offset = 0x4, fixed_abs, tag = 'smem constant byte address 0x4 - core index']
  #allocation1 [shape = 'u32[144,128]{1,0:T(1,128)}', space=vmem, size = 0x12000, scoped, tag = 'internal scratch']
  #allocation2 [shape = 'f32[196,32]{1,0:T(8,128)}', space=vmem, size = 0x19000, scoped, tag = 'scratch operand']
  #allocation3 [shape = 'f32[63,32]{1,0:T(8,128)}', space=vmem, size = 0x8000, scoped, tag = 'scratch operand']
  #allocation4 [shape = 'f32[19,32]{1,0:T(8,128)}', space=vmem, size = 0x3000, scoped, tag = 'scratch operand']
  %s0 = inlined_call_operand.vmem [shape: f32[198,6], index: 0, kind: input, shape index: {}]
  %s1 = inlined_call_operand.vmem [shape: f32[6,32], index: 1, kind: input, shape index: {}]
  %s2 = inlined_call_operand.vmem [shape: f32[1,32], index: 2, kind: input, shape index: {}]
  %s3 = inlined_call_operand.vmem [shape: f32[3,32,32], index: 3, kind: input, shape index: {}]
  %s4 = inlined_call_operand.vmem [shape: f32[1,32], index: 4, kind: input, shape index: {}]
  %s5 = inlined_call_operand.hbm [shape: f32[3,32,32], index: 5, kind: input, shape index: {}]
  %s6 = inlined_call_operand.vmem [shape: f32[1,32], index: 6, kind: input, shape index: {}]
  %s7 = inlined_call_operand.vmem [shape: f32[8,32,128], index: 7, kind: input, shape index: {}]
  %s8 = inlined_call_operand.vmem [shape: f32[1,128], index: 8, kind: input, shape index: {}]
  %s9 = inlined_call_operand.vmem [shape: f32[128,8], index: 9, kind: input, shape index: {}]
  %s10 = inlined_call_operand.vmem [shape: f32[1,8], index: 10, kind: input, shape index: {}]
  %s11 = inlined_call_operand.hbm [shape: f32[2,8], index: 11, kind: output, shape index: {}]
  %s12 = sld [smem:[#allocation0]]
  $region58: #{tpu_custom_call.1} parent=0
    _
  %s14 = ssub.s32 1, %s12
  %s15 = scalar_select 0, %s14, %s12
  $region1: #{tpu_custom_call.1} parent=0
    #allocation5 [shape = 'u8[49152]{0}', space=vmem, size = 0xc000, scoped, tag = 'input window, operand 5, single buffered']
    #allocation6 [shape = 's32[1]{0}', space=sflag, size = 0x4, scoped, tag = 'scoped memory for tpu_custom_call.1']
    #allocation7 [shape = 's32[1]{0}', space=sflag, size = 0x4, scoped, tag = 'scoped memory for tpu_custom_call.1']
    #allocation8 [shape = 'u8[1024]{0}', space=vmem, size = 0x400, scoped, tag = 'output window, operand 0, single buffered']
    %16 = vsyncpa [#allocation6], 0
    %17 = vsyncpa [#allocation7], 0
    // Predicated region
    $region2: #{tpu_custom_call.1} parent=1 // pred_check
      _
    $region3: #{tpu_custom_call.1} parent=1 // pred_check_branch
      %19 = sbr.rel (0) target = $region5
    $region4: #{tpu_custom_call.1} parent=1 // pred_region
      _
    $region5: #{tpu_custom_call.1} parent=1 // pred_fallthru
      _
    // Predicated region
    $region6: #{tpu_custom_call.1} parent=1 // pred_check
      _
    $region7: #{tpu_custom_call.1} parent=1 // pred_check_branch
      %21 = sbr.rel (0) target = $region9
    $region8: #{tpu_custom_call.1} parent=1 // pred_region
      _
    $region9: #{tpu_custom_call.1} parent=1 // pred_fallthru
      _
    // Predicated region
    $region10: #{tpu_custom_call.1} parent=1 // pred_check
      _
    $region11: #{tpu_custom_call.1} parent=1 // pred_check_branch
      %23 = sbr.rel (0) target = $region13
    $region12: #{tpu_custom_call.1} parent=1 // pred_region
      _
    $region13: #{tpu_custom_call.1} parent=1 // pred_fallthru
      _
    // Predicated region
    $region14: #{tpu_custom_call.1} parent=1 // pred_check
      _
    $region15: #{tpu_custom_call.1} parent=1 // pred_check_branch
      %25 = sbr.rel (0) target = $region17
    $region16: #{tpu_custom_call.1} parent=1 // pred_region
      _
    $region17: #{tpu_custom_call.1} parent=1 // pred_fallthru
      _
    // Predicated region
    $region18: #{tpu_custom_call.1} parent=1 // pred_check
      _
    $region19: #{tpu_custom_call.1} parent=1 // pred_check_branch
      %27 = sbr.rel (0) target = $region21
    $region20: #{tpu_custom_call.1} parent=1 // pred_region
      _
    $region21: #{tpu_custom_call.1} parent=1 // pred_fallthru
      _
    // Predicated region
    $region22: #{tpu_custom_call.1} parent=1 // pred_check
      _
    $region23: #{tpu_custom_call.1} parent=1 // pred_check_branch
      %29 = sbr.rel (0) target = $region25
    $region24: #{tpu_custom_call.1} parent=1 // pred_region
      %s31 = ssub.s32 1536, 1536
      %32 = vsyncadd [#allocation6], %s31
      %s33 = sshll.u32 [#allocation5], 4
      %s34 = int_to_ptr.vmem [resolvable:$true] %s33
      %39 = dma.hbm_to_vmem [thread:$0]  %s5, 1536, %s34, [#allocation6], 128, 128, 8
    $region25: #{tpu_custom_call.1} parent=1 // pred_fallthru
      _
    // Predicated region
    $region26: #{tpu_custom_call.1} parent=1 // pred_check
      _
    $region27: #{tpu_custom_call.1} parent=1 // pred_check_branch
      %41 = sbr.rel (0) target = $region29
    $region28: #{tpu_custom_call.1} parent=1 // pred_region
      _
    $region29: #{tpu_custom_call.1} parent=1 // pred_fallthru
      _
    // Predicated region
    $region30: #{tpu_custom_call.1} parent=1 // pred_check
      _
    $region31: #{tpu_custom_call.1} parent=1 // pred_check_branch
      %43 = sbr.rel (0) target = $region33
    $region32: #{tpu_custom_call.1} parent=1 // pred_region
      _
    $region33: #{tpu_custom_call.1} parent=1 // pred_fallthru
      _
    // Predicated region
    $region34: #{tpu_custom_call.1} parent=1 // pred_check
      _
    $region35: #{tpu_custom_call.1} parent=1 // pred_check_branch
      %45 = sbr.rel (0) target = $region37
    $region36: #{tpu_custom_call.1} parent=1 // pred_region
      _
    $region37: #{tpu_custom_call.1} parent=1 // pred_fallthru
      _
    // Predicated region
    $region38: #{tpu_custom_call.1} parent=1 // pred_check
      _
    $region39: #{tpu_custom_call.1} parent=1 // pred_check_branch
      %47 = sbr.rel (0) target = $region41
    $region40: #{tpu_custom_call.1} parent=1 // pred_region
      _
    $region41: #{tpu_custom_call.1} parent=1 // pred_fallthru
      _
    // Predicated region
    $region42: #{tpu_custom_call.1} parent=1 // pred_check
      _
    $region43: #{tpu_custom_call.1} parent=1 // pred_check_branch
      %49 = sbr.rel (0) target = $region45
    $region44: #{tpu_custom_call.1} parent=1 // pred_region
      _
    $region45: #{tpu_custom_call.1} parent=1 // pred_fallthru
      _
    // Predicated region
    $region46: #{tpu_custom_call.1} parent=1 // pred_check
      _
    $region47: #{tpu_custom_call.1} parent=1 // pred_check_branch
      %51 = sbr.rel (0) target = $region49
    $region48: #{tpu_custom_call.1} parent=1 // pred_region
      %52 = dma.done [#allocation6], 1536
    $region49: #{tpu_custom_call.1} parent=1 // pred_fallthru
      _
    %v53 = vld [vmem:[%s0] sm:$0xff]
    %v54 = vld [vmem:[%s0 + $0x8] sm:$0xff]
    %v55 = vld [vmem:[%s0 + $0x10] sm:$0xff]
    %v56 = vld [vmem:[%s0 + $0x18] sm:$0xff]
    %v57 = vld [vmem:[%s0 + $0x20] sm:$0xff]
    %v58 = vld [vmem:[%s0 + $0x28] sm:$0xff]
    %v59 = vld [vmem:[%s0 + $0x30] sm:$0xff]
    %v60 = vld [vmem:[%s0 + $0x38] sm:$0xff]
    %v61 = vld [vmem:[%s0 + $0x40] sm:$0xff]
    %v62 = vld [vmem:[%s0 + $0x48] sm:$0xff]
    %v63 = vld [vmem:[%s0 + $0x50] sm:$0xff]
    %v64 = vld [vmem:[%s0 + $0x58] sm:$0xff]
    %v65 = vld [vmem:[%s0 + $0x60] sm:$0xff]
    %v66 = vld [vmem:[%s0 + $0x68] sm:$0xff]
    %v67 = vld [vmem:[%s0 + $0x70] sm:$0xff]
    %v68 = vld [vmem:[%s0 + $0x78] sm:$0xff]
    %v69 = vld [vmem:[%s0 + $0x80] sm:$0xff]
    %v70 = vld [vmem:[%s0 + $0x88] sm:$0xff]
    %v71 = vld [vmem:[%s0 + $0x90] sm:$0xff]
    %v72 = vld [vmem:[%s0 + $0x98] sm:$0xff]
    %v73 = vld [vmem:[%s0 + $0xa0] sm:$0xff]
    %v74 = vld [vmem:[%s0 + $0xa8] sm:$0xff]
    %v75 = vld [vmem:[%s0 + $0xb0] sm:$0xff]
    %v76 = vld [vmem:[%s0 + $0xb8] sm:$0xff]
    %v77 = vld [vmem:[%s0 + $0xc0] sm:$0xf]
    %v78 = vld [vmem:[%s1] sm:$0x3f]
    %v79 = vld [vmem:[%s2] sm:$0x1]
    %v81 = vlaneseq
    %v82 = vshrl.u32 %v81, 7
    %v83 = vsub.s32 0, %v82
    %v84 = vrot.slane %v79, %v83
    %vm86 = vcmask 48128
    %v88 = vsel %vm86, %v53, 0
    %v91 = vsel %vm86, %v54, 0
    %v94 = vsel %vm86, %v55, 0
    %v97 = vsel %vm86, %v56, 0
    %v100 = vsel %vm86, %v57, 0
    %v103 = vsel %vm86, %v58, 0
    %v106 = vsel %vm86, %v59, 0
    %v109 = vsel %vm86, %v60, 0
    %v112 = vsel %vm86, %v61, 0
    %v115 = vsel %vm86, %v62, 0
    %v118 = vsel %vm86, %v63, 0
    %v121 = vsel %vm86, %v64, 0
    %v124 = vsel %vm86, %v65, 0
    %v127 = vsel %vm86, %v66, 0
    %v130 = vsel %vm86, %v67, 0
    %v133 = vsel %vm86, %v68, 0
    %v136 = vsel %vm86, %v69, 0
    %v139 = vsel %vm86, %v70, 0
    %v142 = vsel %vm86, %v71, 0
    %v145 = vsel %vm86, %v72, 0
    %v148 = vsel %vm86, %v73, 0
    %v151 = vsel %vm86, %v74, 0
    %v154 = vsel %vm86, %v75, 0
    %v157 = vsel %vm86, %v76, 0
    %v160 = vsel %vm86, %v77, 0
    %vm162 = vcmask 1045504
    %v164 = vsel %vm162, %v78, 0
    %166 = vmatprep.subr.mxu0 0.0
    %167 = vmatpush1.msra.mxu0 %v164
    %168 = vmatprep.subr.mxu0 0.0
    %169 = vmatpush1.msra.mxu0 0.0
    %170 = vmatprep.subr.mxu0 0.0
    %171 = vmatpush1.msra.mxu0 0.0
    %172 = vmatprep.subr.mxu0 0.0
    %173 = vmatpush1.msra.mxu0 0.0
    %174 = vmatprep.subr.mxu0 0.0
    %175 = vmatpush1.msra.mxu0 0.0
    %176 = vmatprep.subr.mxu0 0.0
    %177 = vmatpush1.msra.mxu0 0.0
    %178 = vmatprep.subr.mxu0 0.0
    %179 = vmatpush1.msra.mxu0 0.0
    %180 = vmatprep.subr.mxu0 0.0
    %181 = vmatpush1.msra.mxu0 0.0
    %182 = vmatprep.subr.mxu0 0.0
    %183 = vmatpush1.msra.mxu0 0.0
    %184 = vmatprep.subr.mxu0 0.0
    %185 = vmatpush1.msra.mxu0 0.0
    %186 = vmatprep.subr.mxu0 0.0
    %187 = vmatpush1.msra.mxu0 0.0
    %188 = vmatprep.subr.mxu0 0.0
    %189 = vmatpush1.msra.mxu0 0.0
    %190 = vmatprep.subr.mxu0 0.0
    %191 = vmatpush1.msra.mxu0 0.0
    %192 = vmatprep.subr.mxu0 0.0
    %193 = vmatpush1.msra.mxu0 0.0
    %194 = vmatprep.subr.mxu0 0.0
    %195 = vmatpush1.msra.mxu0 0.0
    %196 = vmatprep.subr.mxu0 0.0
    %197 = vmatpush1.msra.mxu0 0.0
    %198 = vmatprep.subr.mxu0 0.0
    %199 = vmatpush1.msra.mxu0 0.0
    %200 = vmatprep.subr.mxu0 0.0
    %201 = vmatpush1.msra.mxu0 0.0
    %202 = vmatprep.subr.mxu0 0.0
    %203 = vmatpush1.msra.mxu0 0.0
    %204 = vmatprep.subr.mxu0 0.0
    %205 = vmatpush1.msra.mxu0 0.0
    %206 = vmatprep.subr.mxu0 0.0
    %207 = vmatpush1.msra.mxu0 0.0
    %208 = vmatprep.subr.mxu0 0.0
    %209 = vmatpush1.msra.mxu0 0.0
    %210 = vmatprep.subr.mxu0 0.0
    %211 = vmatpush1.msra.mxu0 0.0
    %212 = vmatprep.subr.mxu0 0.0
    %213 = vmatpush1.msra.mxu0 0.0
    %214 = vmatprep.subr.mxu0 0.0
    %215 = vmatpush1.msra.mxu0 0.0
    %216 = vmatprep.subr.mxu0 0.0
    %217 = vmatpush1.msra.mxu0 0.0
    %218 = vmatprep.subr.mxu0 0.0
    %219 = vmatpush1.msra.mxu0 0.0
    %220 = vmatprep.subr.mxu0 0.0
    %221 = vmatpush1.msra.mxu0 0.0
    %222 = vmatprep.subr.mxu0 0.0
    %223 = vmatpush1.msra.mxu0 0.0
    %224 = vmatprep.subr.mxu0 0.0
    %225 = vmatpush1.msra.mxu0 0.0
    %226 = vmatprep.subr.mxu0 0.0
    %227 = vmatpush1.msra.mxu0 0.0
    %228 = vmatprep.subr.mxu0 0.0
    %229 = vmatpush1.msra.mxu0 0.0
    %230 = vmatprep.mubr.f32.mxu0 0.0
    %231 = vmatmul.mubr.f32.gmra.mrb[0].mxu0 %v88
    %v232 = vpop.f32.mrb[0].mxu0
    %v233 = vadd.f32 %v84, %v232
    %v234 = vpop.f32.mrb[0].mxu0
    %235 = vmatprep.mubr.f32.mxu0 0.0
    %236 = vmatmul.mubr.f32.gmra.mrb[0].mxu0 %v91
    %v237 = vpop.f32.mrb[0].mxu0
    %v238 = vadd.f32 %v84, %v237
    %v239 = vpop.f32.mrb[0].mxu0
    %240 = vmatprep.mubr.f32.mxu0 0.0
    %241 = vmatmul.mubr.f32.gmra.mrb[0].mxu0 %v94
    %v242 = vpop.f32.mrb[0].mxu0
    %v243 = vadd.f32 %v84, %v242
    %v244 = vpop.f32.mrb[0].mxu0
    %245 = vmatprep.mubr.f32.mxu0 0.0
    %246 = vmatmul.mubr.f32.gmra.mrb[0].mxu0 %v97
    %v247 = vpop.f32.mrb[0].mxu0
    %v248 = vadd.f32 %v84, %v247
    %v249 = vpop.f32.mrb[0].mxu0
    %250 = vmatprep.mubr.f32.mxu0 0.0
    %251 = vmatmul.mubr.f32.gmra.mrb[0].mxu0 %v100
    %v252 = vpop.f32.mrb[0].mxu0
    %v253 = vadd.f32 %v84, %v252
    %v254 = vpop.f32.mrb[0].mxu0
    %255 = vmatprep.mubr.f32.mxu0 0.0
    %256 = vmatmul.mubr.f32.gmra.mrb[0].mxu0 %v103
    %v257 = vpop.f32.mrb[0].mxu0
    %v258 = vadd.f32 %v84, %v257
    %v259 = vpop.f32.mrb[0].mxu0
    %260 = vmatprep.mubr.f32.mxu0 0.0
    %261 = vmatmul.mubr.f32.gmra.mrb[0].mxu0 %v106
    %v262 = vpop.f32.mrb[0].mxu0
    %v263 = vadd.f32 %v84, %v262
    %v264 = vpop.f32.mrb[0].mxu0
    %265 = vmatprep.mubr.f32.mxu0 0.0
    %266 = vmatmul.mubr.f32.gmra.mrb[0].mxu0 %v109
    %v267 = vpop.f32.mrb[0].mxu0
    %v268 = vadd.f32 %v84, %v267
    %v269 = vpop.f32.mrb[0].mxu0
    %270 = vmatprep.mubr.f32.mxu0 0.0
    %271 = vmatmul.mubr.f32.gmra.mrb[0].mxu0 %v112
    %v272 = vpop.f32.mrb[0].mxu0
    %v273 = vadd.f32 %v84, %v272
    %v274 = vpop.f32.mrb[0].mxu0
    %275 = vmatprep.mubr.f32.mxu0 0.0
    %276 = vmatmul.mubr.f32.gmra.mrb[0].mxu0 %v115
    %v277 = vpop.f32.mrb[0].mxu0
    %v278 = vadd.f32 %v84, %v277
    %v279 = vpop.f32.mrb[0].mxu0
    %280 = vmatprep.mubr.f32.mxu0 0.0
    %281 = vmatmul.mubr.f32.gmra.mrb[0].mxu0 %v118
    %v282 = vpop.f32.mrb[0].mxu0
    %v283 = vadd.f32 %v84, %v282
    %v284 = vpop.f32.mrb[0].mxu0
    %285 = vmatprep.mubr.f32.mxu0 0.0
    %286 = vmatmul.mubr.f32.gmra.mrb[0].mxu0 %v121
    %v287 = vpop.f32.mrb[0].mxu0
    %v288 = vadd.f32 %v84, %v287
    %v289 = vpop.f32.mrb[0].mxu0
    %290 = vmatprep.mubr.f32.mxu0 0.0
    %291 = vmatmul.mubr.f32.gmra.mrb[0].mxu0 %v124
    %v292 = vpop.f32.mrb[0].mxu0
    %v293 = vadd.f32 %v84, %v292
    %v294 = vpop.f32.mrb[0].mxu0
    %295 = vmatprep.mubr.f32.mxu0 0.0
    %296 = vmatmul.mubr.f32.gmra.mrb[0].mxu0 %v127
    %v297 = vpop.f32.mrb[0].mxu0
    %v298 = vadd.f32 %v84, %v297
    %v299 = vpop.f32.mrb[0].mxu0
    %300 = vmatprep.mubr.f32.mxu0 0.0
    %301 = vmatmul.mubr.f32.gmra.mrb[0].mxu0 %v130
    %v302 = vpop.f32.mrb[0].mxu0
    %v303 = vadd.f32 %v84, %v302
    %v304 = vpop.f32.mrb[0].mxu0
    %305 = vmatprep.mubr.f32.mxu0 0.0
    %306 = vmatmul.mubr.f32.gmra.mrb[0].mxu0 %v133
    %v307 = vpop.f32.mrb[0].mxu0
    %v308 = vadd.f32 %v84, %v307
    %v309 = vpop.f32.mrb[0].mxu0
    %310 = vmatprep.mubr.f32.mxu0 0.0
    %311 = vmatmul.mubr.f32.gmra.mrb[0].mxu0 %v136
    %v312 = vpop.f32.mrb[0].mxu0
    %v313 = vadd.f32 %v84, %v312
    %v314 = vpop.f32.mrb[0].mxu0
    %315 = vmatprep.mubr.f32.mxu0 0.0
    %316 = vmatmul.mubr.f32.gmra.mrb[0].mxu0 %v139
    %v317 = vpop.f32.mrb[0].mxu0
    %v318 = vadd.f32 %v84, %v317
    %v319 = vpop.f32.mrb[0].mxu0
    %320 = vmatprep.mubr.f32.mxu0 0.0
    %321 = vmatmul.mubr.f32.gmra.mrb[0].mxu0 %v142
    %v322 = vpop.f32.mrb[0].mxu0
    %v323 = vadd.f32 %v84, %v322
    %v324 = vpop.f32.mrb[0].mxu0
    %325 = vmatprep.mubr.f32.mxu0 0.0
    %326 = vmatmul.mubr.f32.gmra.mrb[0].mxu0 %v145
    %v327 = vpop.f32.mrb[0].mxu0
    %v328 = vadd.f32 %v84, %v327
    %v329 = vpop.f32.mrb[0].mxu0
    %330 = vmatprep.mubr.f32.mxu0 0.0
    %331 = vmatmul.mubr.f32.gmra.mrb[0].mxu0 %v148
    %v332 = vpop.f32.mrb[0].mxu0
    %v333 = vadd.f32 %v84, %v332
    %v334 = vpop.f32.mrb[0].mxu0
    %335 = vmatprep.mubr.f32.mxu0 0.0
    %336 = vmatmul.mubr.f32.gmra.mrb[0].mxu0 %v151
    %v337 = vpop.f32.mrb[0].mxu0
    %v338 = vadd.f32 %v84, %v337
    %v339 = vpop.f32.mrb[0].mxu0
    %340 = vmatprep.mubr.f32.mxu0 0.0
    %341 = vmatmul.mubr.f32.gmra.mrb[0].mxu0 %v154
    %v342 = vpop.f32.mrb[0].mxu0
    %v343 = vadd.f32 %v84, %v342
    %v344 = vpop.f32.mrb[0].mxu0
    %345 = vmatprep.mubr.f32.mxu0 0.0
    %346 = vmatmul.mubr.f32.gmra.mrb[0].mxu0 %v157
    %v347 = vpop.f32.mrb[0].mxu0
    %v348 = vadd.f32 %v84, %v347
    %v349 = vpop.f32.mrb[0].mxu0
    %350 = vmatprep.mubr.f32.mxu0 0.0
    %351 = vmatmul.mubr.f32.gmra.mrb[0].mxu0 %v160
    %v352 = vpop.f32.mrb[0].mxu0
    %v353 = vadd.f32 %v84, %v352
    %v354 = vpop.f32.mrb[0].mxu0
    %355 = vdwg.mxu0
    %v356 = vmax.f32 %v233, 0.0
    %v357 = vmax.f32 %v238, 0.0
    %v358 = vmax.f32 %v243, 0.0
    %v359 = vmax.f32 %v248, 0.0
    %v360 = vmax.f32 %v253, 0.0
    %v361 = vmax.f32 %v258, 0.0
    %v362 = vmax.f32 %v263, 0.0
    %v363 = vmax.f32 %v268, 0.0
    %v364 = vmax.f32 %v273, 0.0
    %v365 = vmax.f32 %v278, 0.0
    %v366 = vmax.f32 %v283, 0.0
    %v367 = vmax.f32 %v288, 0.0
    %v368 = vmax.f32 %v293, 0.0
    %v369 = vmax.f32 %v298, 0.0
    %v370 = vmax.f32 %v303, 0.0
    %v371 = vmax.f32 %v308, 0.0
    %v372 = vmax.f32 %v313, 0.0
    %v373 = vmax.f32 %v318, 0.0
    %v374 = vmax.f32 %v323, 0.0
    %v375 = vmax.f32 %v328, 0.0
    %v376 = vmax.f32 %v333, 0.0
    %v377 = vmax.f32 %v338, 0.0
    %v378 = vmax.f32 %v343, 0.0
    %v379 = vmax.f32 %v348, 0.0
    %v380 = vmax.f32 %v353, 0.0
    %vm381 = vcmask 261120
    %382 = vst.msk [vmem:[#allocation2] sm:$0xff] %vm381, %v356
    %383 = vst.msk [vmem:[#allocation2 + $0x8] sm:$0xff] %vm381, %v357
    %384 = vst.msk [vmem:[#allocation2 + $0x10] sm:$0xff] %vm381, %v358
    %385 = vst.msk [vmem:[#allocation2 + $0x18] sm:$0xff] %vm381, %v359
    %386 = vst.msk [vmem:[#allocation2 + $0x20] sm:$0xff] %vm381, %v360
    %387 = vst.msk [vmem:[#allocation2 + $0x28] sm:$0xff] %vm381, %v361
    %388 = vst.msk [vmem:[#allocation2 + $0x30] sm:$0xff] %vm381, %v362
    %389 = vst.msk [vmem:[#allocation2 + $0x38] sm:$0xff] %vm381, %v363
    %390 = vst.msk [vmem:[#allocation2 + $0x40] sm:$0xff] %vm381, %v364
    %391 = vst.msk [vmem:[#allocation2 + $0x48] sm:$0xff] %vm381, %v365
    %392 = vst.msk [vmem:[#allocation2 + $0x50] sm:$0xff] %vm381, %v366
    %393 = vst.msk [vmem:[#allocation2 + $0x58] sm:$0xff] %vm381, %v367
    %394 = vst.msk [vmem:[#allocation2 + $0x60] sm:$0xff] %vm381, %v368
    %395 = vst.msk [vmem:[#allocation2 + $0x68] sm:$0xff] %vm381, %v369
    %396 = vst.msk [vmem:[#allocation2 + $0x70] sm:$0xff] %vm381, %v370
    %397 = vst.msk [vmem:[#allocation2 + $0x78] sm:$0xff] %vm381, %v371
    %398 = vst.msk [vmem:[#allocation2 + $0x80] sm:$0xff] %vm381, %v372
    %399 = vst.msk [vmem:[#allocation2 + $0x88] sm:$0xff] %vm381, %v373
    %400 = vst.msk [vmem:[#allocation2 + $0x90] sm:$0xff] %vm381, %v374
    %401 = vst.msk [vmem:[#allocation2 + $0x98] sm:$0xff] %vm381, %v375
    %402 = vst.msk [vmem:[#allocation2 + $0xa0] sm:$0xff] %vm381, %v376
    %403 = vst.msk [vmem:[#allocation2 + $0xa8] sm:$0xff] %vm381, %v377
    %404 = vst.msk [vmem:[#allocation2 + $0xb0] sm:$0xff] %vm381, %v378
    %405 = vst.msk [vmem:[#allocation2 + $0xb8] sm:$0xff] %vm381, %v379
    %vm406 = vcmask 257024
    %407 = vst.msk [vmem:[#allocation2 + $0xc0] sm:$0xf] %vm406, %v380
    %v408 = vld [vmem:[#allocation2] ss:$3 sm:$0xff]
    %s409 = scalar_lea.vmem [#allocation2], 24
    %v410 = vld [vmem:[%s409] ss:$3 sm:$0xff]
    %s411 = scalar_lea.vmem [#allocation2], 48
    %v412 = vld [vmem:[%s411] ss:$3 sm:$0xff]
    %s413 = scalar_lea.vmem [#allocation2], 72
    %v414 = vld [vmem:[%s413] ss:$3 sm:$0xff]
    %s415 = scalar_lea.vmem [#allocation2], 96
    %v416 = vld [vmem:[%s415] ss:$3 sm:$0xff]
    %s417 = scalar_lea.vmem [#allocation2], 120
    %v418 = vld [vmem:[%s417] ss:$3 sm:$0xff]
    %s419 = scalar_lea.vmem [#allocation2], 144
    %v420 = vld [vmem:[%s419] ss:$3 sm:$0xff]
    %s421 = scalar_lea.vmem [#allocation2], 168
    %v422 = vld [vmem:[%s421] ss:$3 sm:$0xff]
    %s423 = scalar_lea.vmem [#allocation2], 192
    %v424 = vld [vmem:[%s423] ss:$3 sm:$0x1]
    %s425 = scalar_lea.vmem [#allocation2], 1
    %v426 = vld [vmem:[%s425] ss:$3 sm:$0xff]
    %s427 = scalar_lea.vmem [#allocation2], 25
    %v428 = vld [vmem:[%s427] ss:$3 sm:$0xff]
    %s429 = scalar_lea.vmem [#allocation2], 49
    %v430 = vld [vmem:[%s429] ss:$3 sm:$0xff]
    %s431 = scalar_lea.vmem [#allocation2], 73
    %v432 = vld [vmem:[%s431] ss:$3 sm:$0xff]
    %s433 = scalar_lea.vmem [#allocation2], 97
    %v434 = vld [vmem:[%s433] ss:$3 sm:$0xff]
    %s435 = scalar_lea.vmem [#allocation2], 121
    %v436 = vld [vmem:[%s435] ss:$3 sm:$0xff]
    %s437 = scalar_lea.vmem [#allocation2], 145
    %v438 = vld [vmem:[%s437] ss:$3 sm:$0xff]
    %s439 = scalar_lea.vmem [#allocation2], 169
    %v440 = vld [vmem:[%s439] ss:$3 sm:$0xff]
    %s441 = scalar_lea.vmem [#allocation2], 193
    %v442 = vld [vmem:[%s441] ss:$3 sm:$0x1]
    %v443 = vmax.f32 %v408, %v426
    %v444 = vmax.f32 %v410, %v428
    %v445 = vmax.f32 %v412, %v430
    %v446 = vmax.f32 %v414, %v432
    %v447 = vmax.f32 %v416, %v434
    %v448 = vmax.f32 %v418, %v436
    %v449 = vmax.f32 %v420, %v438
    %v450 = vmax.f32 %v422, %v440
    %v451 = vmax.f32 %v424, %v442
    %s452 = scalar_lea.vmem [#allocation2], 2
    %v453 = vld [vmem:[%s452] ss:$3 sm:$0xff]
    %s454 = scalar_lea.vmem [#allocation2], 26
    %v455 = vld [vmem:[%s454] ss:$3 sm:$0xff]
    %s456 = scalar_lea.vmem [#allocation2], 50
    %v457 = vld [vmem:[%s456] ss:$3 sm:$0xff]
    %s458 = scalar_lea.vmem [#allocation2], 74
    %v459 = vld [vmem:[%s458] ss:$3 sm:$0xff]
    %s460 = scalar_lea.vmem [#allocation2], 98
    %v461 = vld [vmem:[%s460] ss:$3 sm:$0xff]
    %s462 = scalar_lea.vmem [#allocation2], 122
    %v463 = vld [vmem:[%s462] ss:$3 sm:$0xff]
    %s464 = scalar_lea.vmem [#allocation2], 146
    %v465 = vld [vmem:[%s464] ss:$3 sm:$0xff]
    %s466 = scalar_lea.vmem [#allocation2], 170
    %v467 = vld [vmem:[%s466] ss:$3 sm:$0xff]
    %s468 = scalar_lea.vmem [#allocation2], 194
    %v469 = vld [vmem:[%s468] ss:$3 sm:$0x1]
    %v470 = vmax.f32 %v443, %v453
    %v471 = vmax.f32 %v444, %v455
    %v472 = vmax.f32 %v445, %v457
    %v473 = vmax.f32 %v446, %v459
    %v474 = vmax.f32 %v447, %v461
    %v475 = vmax.f32 %v448, %v463
    %v476 = vmax.f32 %v449, %v465
    %v477 = vmax.f32 %v450, %v467
    %v478 = vmax.f32 %v451, %v469
    %v479 = vld [vmem:[%s3] sm:$0xff]
    %v480 = vld [vmem:[%s3 + $0x8] sm:$0xff]
    %v481 = vld [vmem:[%s3 + $0x10] sm:$0xff]
    %v482 = vld [vmem:[%s3 + $0x18] sm:$0xff]
    %s483 = scalar_lea.vmem %s3, 32
    %v484 = vld [vmem:[%s483] sm:$0xff]
    %v485 = vld [vmem:[%s483 + $0x8] sm:$0xff]
    %v486 = vld [vmem:[%s483 + $0x10] sm:$0xff]
    %v487 = vld [vmem:[%s483 + $0x18] sm:$0xff]
    %vm496 = vcmask 1046528
    %v497 = vrot.slane %v470, 1
    %v498 = vrot.slane %v471, 1
    %v499 = vsel %vm496, %v497, %v498
    %v500 = vrot.slane %v472, 1
    %v501 = vsel %vm496, %v498, %v500
    %v502 = vrot.slane %v473, 1
    %v503 = vsel %vm496, %v500, %v502
    %v504 = vrot.slane %v474, 1
    %v505 = vsel %vm496, %v502, %v504
    %v506 = vrot.slane %v475, 1
    %v507 = vsel %vm496, %v504, %v506
    %v508 = vrot.slane %v476, 1
    %v509 = vsel %vm496, %v506, %v508
    %v510 = vrot.slane %v477, 1
    %v511 = vsel %vm496, %v508, %v510
    %v512 = vsel %vm381, %v499, 0
    %v514 = vsel %vm381, %v501, 0
    %v516 = vsel %vm381, %v503, 0
    %v518 = vsel %vm381, %v505, 0
    %v520 = vsel %vm381, %v507, 0
    %v522 = vsel %vm381, %v509, 0
    %v524 = vsel %vm381, %v511, 0
    %v526 = vsel %vm381, %v510, 0
    %528 = vmatprep.subr.mxu0 0.0
    %529 = vmatpush1.msra.mxu0 %v484
    %530 = vmatprep.subr.mxu0 0.0
    %531 = vmatpush1.msra.mxu0 %v485
    %532 = vmatprep.subr.mxu0 0.0
    %533 = vmatpush1.msra.mxu0 %v486
    %534 = vmatprep.subr.mxu0 0.0
    %535 = vmatpush1.msra.mxu0 %v487
    %536 = vmatprep.subr.mxu0 0.0
    %537 = vmatpush1.msra.mxu0 0.0
    %538 = vmatprep.subr.mxu0 0.0
    %539 = vmatpush1.msra.mxu0 0.0
    %540 = vmatprep.subr.mxu0 0.0
    %541 = vmatpush1.msra.mxu0 0.0
    %542 = vmatprep.subr.mxu0 0.0
    %543 = vmatpush1.msra.mxu0 0.0
    %544 = vmatprep.subr.mxu0 0.0
    %545 = vmatpush1.msra.mxu0 0.0
    %546 = vmatprep.subr.mxu0 0.0
    %547 = vmatpush1.msra.mxu0 0.0
    %548 = vmatprep.subr.mxu0 0.0
    %549 = vmatpush1.msra.mxu0 0.0
    %550 = vmatprep.subr.mxu0 0.0
    %551 = vmatpush1.msra.mxu0 0.0
    %552 = vmatprep.subr.mxu0 0.0
    %553 = vmatpush1.msra.mxu0 0.0
    %554 = vmatprep.subr.mxu0 0.0
    %555 = vmatpush1.msra.mxu0 0.0
    %556 = vmatprep.subr.mxu0 0.0
    %557 = vmatpush1.msra.mxu0 0.0
    %558 = vmatprep.subr.mxu0 0.0
    %559 = vmatpush1.msra.mxu0 0.0
    %560 = vmatprep.subr.mxu0 0.0
    %561 = vmatpush1.msra.mxu0 0.0
    %562 = vmatprep.subr.mxu0 0.0
    %563 = vmatpush1.msra.mxu0 0.0
    %564 = vmatprep.subr.mxu0 0.0
    %565 = vmatpush1.msra.mxu0 0.0
    %566 = vmatprep.subr.mxu0 0.0
    %567 = vmatpush1.msra.mxu0 0.0
    %568 = vmatprep.subr.mxu0 0.0
    %569 = vmatpush1.msra.mxu0 0.0
    %570 = vmatprep.subr.mxu0 0.0
    %571 = vmatpush1.msra.mxu0 0.0
    %572 = vmatprep.subr.mxu0 0.0
    %573 = vmatpush1.msra.mxu0 0.0
    %574 = vmatprep.subr.mxu0 0.0
    %575 = vmatpush1.msra.mxu0 0.0
    %576 = vmatprep.subr.mxu0 0.0
    %577 = vmatpush1.msra.mxu0 0.0
    %578 = vmatprep.subr.mxu0 0.0
    %579 = vmatpush1.msra.mxu0 0.0
    %580 = vmatprep.subr.mxu0 0.0
    %581 = vmatpush1.msra.mxu0 0.0
    %582 = vmatprep.subr.mxu0 0.0
    %583 = vmatpush1.msra.mxu0 0.0
    %584 = vmatprep.subr.mxu0 0.0
    %585 = vmatpush1.msra.mxu0 0.0
    %586 = vmatprep.subr.mxu0 0.0
    %587 = vmatpush1.msra.mxu0 0.0
    %588 = vmatprep.subr.mxu0 0.0
    %589 = vmatpush1.msra.mxu0 0.0
    %590 = vmatprep.subr.mxu0 0.0
    %591 = vmatpush1.msra.mxu0 0.0
    %592 = vmatprep.mubr.f32.mxu0 0.0
    %593 = vmatmul.mubr.f32.gmra.mrb[0].mxu0 %v512
    %v594 = vpop.f32.mrb[0].mxu0
    %v595 = vadd.f32 0.0, %v594
    %v596 = vpop.f32.mrb[0].mxu0
    %597 = vmatprep.mubr.f32.mxu0 0.0
    %598 = vmatmul.mubr.f32.gmra.mrb[0].mxu0 %v514
    %v599 = vpop.f32.mrb[0].mxu0
    %v600 = vadd.f32 0.0, %v599
    %v601 = vpop.f32.mrb[0].mxu0
    %602 = vmatprep.mubr.f32.mxu0 0.0
    %603 = vmatmul.mubr.f32.gmra.mrb[0].mxu0 %v516
    %v604 = vpop.f32.mrb[0].mxu0
    %v605 = vadd.f32 0.0, %v604
    %v606 = vpop.f32.mrb[0].mxu0
    %607 = vmatprep.mubr.f32.mxu0 0.0
    %608 = vmatmul.mubr.f32.gmra.mrb[0].mxu0 %v518
    %v609 = vpop.f32.mrb[0].mxu0
    %v610 = vadd.f32 0.0, %v609
    %v611 = vpop.f32.mrb[0].mxu0
    %612 = vmatprep.mubr.f32.mxu0 0.0
    %613 = vmatmul.mubr.f32.gmra.mrb[0].mxu0 %v520
    %v614 = vpop.f32.mrb[0].mxu0
    %v615 = vadd.f32 0.0, %v614
    %v616 = vpop.f32.mrb[0].mxu0
    %617 = vmatprep.mubr.f32.mxu0 0.0
    %618 = vmatmul.mubr.f32.gmra.mrb[0].mxu0 %v522
    %v619 = vpop.f32.mrb[0].mxu0
    %v620 = vadd.f32 0.0, %v619
    %v621 = vpop.f32.mrb[0].mxu0
    %622 = vmatprep.mubr.f32.mxu0 0.0
    %623 = vmatmul.mubr.f32.gmra.mrb[0].mxu0 %v524
    %v624 = vpop.f32.mrb[0].mxu0
    %v625 = vadd.f32 0.0, %v624
    %v626 = vpop.f32.mrb[0].mxu0
    %627 = vmatprep.mubr.f32.mxu0 0.0
    %628 = vmatmul.mubr.f32.gmra.mrb[0].mxu0 %v526
    %v629 = vpop.f32.mrb[0].mxu0
    %v630 = vadd.f32 0.0, %v629
    %v631 = vpop.f32.mrb[0].mxu0
    %632 = vdwg.mxu0
    %v633 = vsel %vm381, %v470, 0
    %v635 = vsel %vm381, %v471, 0
    %v637 = vsel %vm381, %v472, 0
    %v639 = vsel %vm381, %v473, 0
    %v641 = vsel %vm381, %v474, 0
    %v643 = vsel %vm381, %v475, 0
    %v645 = vsel %vm381, %v476, 0
    %v647 = vsel %vm381, %v477, 0
    %649 = vmatprep.subr.mxu0 0.0
    %650 = vmatpush1.msra.mxu0 %v479
    %651 = vmatprep.subr.mxu0 0.0
    %652 = vmatpush1.msra.mxu0 %v480
    %653 = vmatprep.subr.mxu0 0.0
    %654 = vmatpush1.msra.mxu0 %v481
    %655 = vmatprep.subr.mxu0 0.0
    %656 = vmatpush1.msra.mxu0 %v482
    %657 = vmatprep.subr.mxu0 0.0
    %658 = vmatpush1.msra.mxu0 0.0
    %659 = vmatprep.subr.mxu0 0.0
    %660 = vmatpush1.msra.mxu0 0.0
    %661 = vmatprep.subr.mxu0 0.0
    %662 = vmatpush1.msra.mxu0 0.0
    %663 = vmatprep.subr.mxu0 0.0
    %664 = vmatpush1.msra.mxu0 0.0
    %665 = vmatprep.subr.mxu0 0.0
    %666 = vmatpush1.msra.mxu0 0.0
    %667 = vmatprep.subr.mxu0 0.0
    %668 = vmatpush1.msra.mxu0 0.0
    %669 = vmatprep.subr.mxu0 0.0
    %670 = vmatpush1.msra.mxu0 0.0
    %671 = vmatprep.subr.mxu0 0.0
    %672 = vmatpush1.msra.mxu0 0.0
    %673 = vmatprep.subr.mxu0 0.0
    %674 = vmatpush1.msra.mxu0 0.0
    %675 = vmatprep.subr.mxu0 0.0
    %676 = vmatpush1.msra.mxu0 0.0
    %677 = vmatprep.subr.mxu0 0.0
    %678 = vmatpush1.msra.mxu0 0.0
    %679 = vmatprep.subr.mxu0 0.0
    %680 = vmatpush1.msra.mxu0 0.0
    %681 = vmatprep.subr.mxu0 0.0
    %682 = vmatpush1.msra.mxu0 0.0
    %683 = vmatprep.subr.mxu0 0.0
    %684 = vmatpush1.msra.mxu0 0.0
    %685 = vmatprep.subr.mxu0 0.0
    %686 = vmatpush1.msra.mxu0 0.0
    %687 = vmatprep.subr.mxu0 0.0
    %688 = vmatpush1.msra.mxu0 0.0
    %689 = vmatprep.subr.mxu0 0.0
    %690 = vmatpush1.msra.mxu0 0.0
    %691 = vmatprep.subr.mxu0 0.0
    %692 = vmatpush1.msra.mxu0 0.0
    %693 = vmatprep.subr.mxu0 0.0
    %694 = vmatpush1.msra.mxu0 0.0
    %695 = vmatprep.subr.mxu0 0.0
    %696 = vmatpush1.msra.mxu0 0.0
    %697 = vmatprep.subr.mxu0 0.0
    %698 = vmatpush1.msra.mxu0 0.0
    %699 = vmatprep.subr.mxu0 0.0
    %700 = vmatpush1.msra.mxu0 0.0
    %701 = vmatprep.subr.mxu0 0.0
    %702 = vmatpush1.msra.mxu0 0.0
    %703 = vmatprep.subr.mxu0 0.0
    %704 = vmatpush1.msra.mxu0 0.0
    %705 = vmatprep.subr.mxu0 0.0
    %706 = vmatpush1.msra.mxu0 0.0
    %707 = vmatprep.subr.mxu0 0.0
    %708 = vmatpush1.msra.mxu0 0.0
    %709 = vmatprep.subr.mxu0 0.0
    %710 = vmatpush1.msra.mxu0 0.0
    %711 = vmatprep.subr.mxu0 0.0
    %712 = vmatpush1.msra.mxu0 0.0
    %713 = vmatprep.mubr.f32.mxu0 0.0
    %714 = vmatmul.mubr.f32.gmra.mrb[0].mxu0 %v633
    %v715 = vpop.f32.mrb[0].mxu0
    %v716 = vadd.f32 %v595, %v715
    %v717 = vpop.f32.mrb[0].mxu0
    %718 = vmatprep.mubr.f32.mxu0 0.0
    %719 = vmatmul.mubr.f32.gmra.mrb[0].mxu0 %v635
    %v720 = vpop.f32.mrb[0].mxu0
    %v721 = vadd.f32 %v600, %v720
    %v722 = vpop.f32.mrb[0].mxu0
    %723 = vmatprep.mubr.f32.mxu0 0.0
    %724 = vmatmul.mubr.f32.gmra.mrb[0].mxu0 %v637
    %v725 = vpop.f32.mrb[0].mxu0
    %v726 = vadd.f32 %v605, %v725
    %v727 = vpop.f32.mrb[0].mxu0
    %728 = vmatprep.mubr.f32.mxu0 0.0
    %729 = vmatmul.mubr.f32.gmra.mrb[0].mxu0 %v639
    %v730 = vpop.f32.mrb[0].mxu0
    %v731 = vadd.f32 %v610, %v730
    %v732 = vpop.f32.mrb[0].mxu0
    %733 = vmatprep.mubr.f32.mxu0 0.0
    %734 = vmatmul.mubr.f32.gmra.mrb[0].mxu0 %v641
    %v735 = vpop.f32.mrb[0].mxu0
    %v736 = vadd.f32 %v615, %v735
    %v737 = vpop.f32.mrb[0].mxu0
    %738 = vmatprep.mubr.f32.mxu0 0.0
    %739 = vmatmul.mubr.f32.gmra.mrb[0].mxu0 %v643
    %v740 = vpop.f32.mrb[0].mxu0
    %v741 = vadd.f32 %v620, %v740
    %v742 = vpop.f32.mrb[0].mxu0
    %743 = vmatprep.mubr.f32.mxu0 0.0
    %744 = vmatmul.mubr.f32.gmra.mrb[0].mxu0 %v645
    %v745 = vpop.f32.mrb[0].mxu0
    %v746 = vadd.f32 %v625, %v745
    %v747 = vpop.f32.mrb[0].mxu0
    %748 = vmatprep.mubr.f32.mxu0 0.0
    %749 = vmatmul.mubr.f32.gmra.mrb[0].mxu0 %v647
    %v750 = vpop.f32.mrb[0].mxu0
    %v751 = vadd.f32 %v630, %v750
    %v752 = vpop.f32.mrb[0].mxu0
    %753 = vdwg.mxu0
    %s754 = scalar_lea.vmem %s3, 64
    %v755 = vld [vmem:[%s754] sm:$0xff]
    %v756 = vld [vmem:[%s754 + $0x8] sm:$0xff]
    %v757 = vld [vmem:[%s754 + $0x10] sm:$0xff]
    %v758 = vld [vmem:[%s754 + $0x18] sm:$0xff]
    %v760 = vrot.slane %v470, 2
    %v761 = vrot.slane %v471, 2
    %v762 = vsel %vm162, %v760, %v761
    %v763 = vrot.slane %v472, 2
    %v764 = vsel %vm162, %v761, %v763
    %v765 = vrot.slane %v473, 2
    %v766 = vsel %vm162, %v763, %v765
    %v767 = vrot.slane %v474, 2
    %v768 = vsel %vm162, %v765, %v767
    %v769 = vrot.slane %v475, 2
    %v770 = vsel %vm162, %v767, %v769
    %v771 = vrot.slane %v476, 2
    %v772 = vsel %vm162, %v769, %v771
    %v773 = vrot.slane %v477, 2
    %v774 = vsel %vm162, %v771, %v773
    %v775 = vrot.slane %v478, 2
    %v776 = vsel %vm162, %v773, %v775
    %v777 = vsel %vm381, %v762, 0
    %v779 = vsel %vm381, %v764, 0
    %v781 = vsel %vm381, %v766, 0
    %v783 = vsel %vm381, %v768, 0
    %v785 = vsel %vm381, %v770, 0
    %v787 = vsel %vm381, %v772, 0
    %v789 = vsel %vm381, %v774, 0
    %v791 = vsel %vm381, %v776, 0
    %793 = vmatprep.subr.mxu0 0.0
    %794 = vmatpush1.msra.mxu0 %v755
    %795 = vmatprep.subr.mxu0 0.0
    %796 = vmatpush1.msra.mxu0 %v756
    %797 = vmatprep.subr.mxu0 0.0
    %798 = vmatpush1.msra.mxu0 %v757
    %799 = vmatprep.subr.mxu0 0.0
    %800 = vmatpush1.msra.mxu0 %v758
    %801 = vmatprep.subr.mxu0 0.0
    %802 = vmatpush1.msra.mxu0 0.0
    %803 = vmatprep.subr.mxu0 0.0
    %804 = vmatpush1.msra.mxu0 0.0
    %805 = vmatprep.subr.mxu0 0.0
    %806 = vmatpush1.msra.mxu0 0.0
    %807 = vmatprep.subr.mxu0 0.0
    %808 = vmatpush1.msra.mxu0 0.0
    %809 = vmatprep.subr.mxu0 0.0
    %810 = vmatpush1.msra.mxu0 0.0
    %811 = vmatprep.subr.mxu0 0.0
    %812 = vmatpush1.msra.mxu0 0.0
    %813 = vmatprep.subr.mxu0 0.0
    %814 = vmatpush1.msra.mxu0 0.0
    %815 = vmatprep.subr.mxu0 0.0
    %816 = vmatpush1.msra.mxu0 0.0
    %817 = vmatprep.subr.mxu0 0.0
    %818 = vmatpush1.msra.mxu0 0.0
    %819 = vmatprep.subr.mxu0 0.0
    %820 = vmatpush1.msra.mxu0 0.0
    %821 = vmatprep.subr.mxu0 0.0
    %822 = vmatpush1.msra.mxu0 0.0
    %823 = vmatprep.subr.mxu0 0.0
    %824 = vmatpush1.msra.mxu0 0.0
    %825 = vmatprep.subr.mxu0 0.0
    %826 = vmatpush1.msra.mxu0 0.0
    %827 = vmatprep.subr.mxu0 0.0
    %828 = vmatpush1.msra.mxu0 0.0
    %829 = vmatprep.subr.mxu0 0.0
    %830 = vmatpush1.msra.mxu0 0.0
    %831 = vmatprep.subr.mxu0 0.0
    %832 = vmatpush1.msra.mxu0 0.0
    %833 = vmatprep.subr.mxu0 0.0
    %834 = vmatpush1.msra.mxu0 0.0
    %835 = vmatprep.subr.mxu0 0.0
    %836 = vmatpush1.msra.mxu0 0.0
    %837 = vmatprep.subr.mxu0 0.0
    %838 = vmatpush1.msra.mxu0 0.0
    %839 = vmatprep.subr.mxu0 0.0
    %840 = vmatpush1.msra.mxu0 0.0
    %841 = vmatprep.subr.mxu0 0.0
    %842 = vmatpush1.msra.mxu0 0.0
    %843 = vmatprep.subr.mxu0 0.0
    %844 = vmatpush1.msra.mxu0 0.0
    %845 = vmatprep.subr.mxu0 0.0
    %846 = vmatpush1.msra.mxu0 0.0
    %847 = vmatprep.subr.mxu0 0.0
    %848 = vmatpush1.msra.mxu0 0.0
    %849 = vmatprep.subr.mxu0 0.0
    %850 = vmatpush1.msra.mxu0 0.0
    %851 = vmatprep.subr.mxu0 0.0
    %852 = vmatpush1.msra.mxu0 0.0
    %853 = vmatprep.subr.mxu0 0.0
    %854 = vmatpush1.msra.mxu0 0.0
    %855 = vmatprep.subr.mxu0 0.0
    %856 = vmatpush1.msra.mxu0 0.0
    %857 = vmatprep.mubr.f32.mxu0 0.0
    %858 = vmatmul.mubr.f32.gmra.mrb[0].mxu0 %v777
    %v859 = vpop.f32.mrb[0].mxu0
    %v860 = vadd.f32 0.0, %v859
    %v861 = vpop.f32.mrb[0].mxu0
    %862 = vmatprep.mubr.f32.mxu0 0.0
    %863 = vmatmul.mubr.f32.gmra.mrb[0].mxu0 %v779
    %v864 = vpop.f32.mrb[0].mxu0
    %v865 = vadd.f32 0.0, %v864
    %v866 = vpop.f32.mrb[0].mxu0
    %867 = vmatprep.mubr.f32.mxu0 0.0
    %868 = vmatmul.mubr.f32.gmra.mrb[0].mxu0 %v781
    %v869 = vpop.f32.mrb[0].mxu0
    %v870 = vadd.f32 0.0, %v869
    %v871 = vpop.f32.mrb[0].mxu0
    %872 = vmatprep.mubr.f32.mxu0 0.0
    %873 = vmatmul.mubr.f32.gmra.mrb[0].mxu0 %v783
    %v874 = vpop.f32.mrb[0].mxu0
    %v875 = vadd.f32 0.0, %v874
    %v876 = vpop.f32.mrb[0].mxu0
    %877 = vmatprep.mubr.f32.mxu0 0.0
    %878 = vmatmul.mubr.f32.gmra.mrb[0].mxu0 %v785
    %v879 = vpop.f32.mrb[0].mxu0
    %v880 = vadd.f32 0.0, %v879
    %v881 = vpop.f32.mrb[0].mxu0
    %882 = vmatprep.mubr.f32.mxu0 0.0
    %883 = vmatmul.mubr.f32.gmra.mrb[0].mxu0 %v787
    %v884 = vpop.f32.mrb[0].mxu0
    %v885 = vadd.f32 0.0, %v884
    %v886 = vpop.f32.mrb[0].mxu0
    %887 = vmatprep.mubr.f32.mxu0 0.0
    %888 = vmatmul.mubr.f32.gmra.mrb[0].mxu0 %v789
    %v889 = vpop.f32.mrb[0].mxu0
    %v890 = vadd.f32 0.0, %v889
    %v891 = vpop.f32.mrb[0].mxu0
    %892 = vmatprep.mubr.f32.mxu0 0.0
    %893 = vmatmul.mubr.f32.gmra.mrb[0].mxu0 %v791
    %v894 = vpop.f32.mrb[0].mxu0
    %v895 = vadd.f32 0.0, %v894
    %v896 = vpop.f32.mrb[0].mxu0
    %897 = vdwg.mxu0
    %v898 = vadd.f32 %v716, %v860
    %v899 = vadd.f32 %v721, %v865
    %v900 = vadd.f32 %v726, %v870
    %v901 = vadd.f32 %v731, %v875
    %v902 = vadd.f32 %v736, %v880
    %v903 = vadd.f32 %v741, %v885
    %v904 = vadd.f32 %v746, %v890
    %v905 = vadd.f32 %v751, %v895
    %v906 = vld [vmem:[%s4] sm:$0x1]
    %v908 = vlaneseq
    %v909 = vshrl.u32 %v908, 7
    %v910 = vsub.s32 0, %v909
    %v911 = vrot.slane %v906, %v910
    %v913 = vadd.f32 %v898, %v911
    %v914 = vadd.f32 %v899, %v911
    %v915 = vadd.f32 %v900, %v911
    %v916 = vadd.f32 %v901, %v911
    %v917 = vadd.f32 %v902, %v911
    %v918 = vadd.f32 %v903, %v911
    %v919 = vadd.f32 %v904, %v911
    %v920 = vadd.f32 %v905, %v911
    %v921 = vmax.f32 %v913, 0.0
    %v922 = vmax.f32 %v914, 0.0
    %v923 = vmax.f32 %v915, 0.0
    %v924 = vmax.f32 %v916, 0.0
    %v925 = vmax.f32 %v917, 0.0
    %v926 = vmax.f32 %v918, 0.0
    %v927 = vmax.f32 %v919, 0.0
    %v928 = vmax.f32 %v920, 0.0
    %929 = vst.msk [vmem:[#allocation3] sm:$0xff] %vm381, %v921
    %930 = vst.msk [vmem:[#allocation3 + $0x8] sm:$0xff] %vm381, %v922
    %931 = vst.msk [vmem:[#allocation3 + $0x10] sm:$0xff] %vm381, %v923
    %932 = vst.msk [vmem:[#allocation3 + $0x18] sm:$0xff] %vm381, %v924
    %933 = vst.msk [vmem:[#allocation3 + $0x20] sm:$0xff] %vm381, %v925
    %934 = vst.msk [vmem:[#allocation3 + $0x28] sm:$0xff] %vm381, %v926
    %935 = vst.msk [vmem:[#allocation3 + $0x30] sm:$0xff] %vm381, %v927
    %vm936 = vcmask 260096
    %937 = vst.msk [vmem:[#allocation3 + $0x38] sm:$0x7f] %vm936, %v928
    %v938 = vld [vmem:[#allocation3] ss:$3 sm:$0xff]
    %s939 = scalar_lea.vmem [#allocation3], 24
    %v940 = vld [vmem:[%s939] ss:$3 sm:$0xff]
    %s941 = scalar_lea.vmem [#allocation3], 48
    %v942 = vld [vmem:[%s941] ss:$3 sm:$0x1f]
    %s943 = scalar_lea.vmem [#allocation3], 1
    %v944 = vld [vmem:[%s943] ss:$3 sm:$0xff]
    %s945 = scalar_lea.vmem [#allocation3], 25
    %v946 = vld [vmem:[%s945] ss:$3 sm:$0xff]
    %s947 = scalar_lea.vmem [#allocation3], 49
    %v948 = vld [vmem:[%s947] ss:$3 sm:$0x1f]
    %v949 = vmax.f32 %v938, %v944
    %v950 = vmax.f32 %v940, %v946
    %v951 = vmax.f32 %v942, %v948
    %s952 = scalar_lea.vmem [#allocation3], 2
    %v953 = vld [vmem:[%s952] ss:$3 sm:$0xff]
    %s954 = scalar_lea.vmem [#allocation3], 26
    %v955 = vld [vmem:[%s954] ss:$3 sm:$0xff]
    %s956 = scalar_lea.vmem [#allocation3], 50
    %v957 = vld [vmem:[%s956] ss:$3 sm:$0x1f]
    %v958 = vmax.f32 %v949, %v953
    %v959 = vmax.f32 %v950, %v955
    %v960 = vmax.f32 %v951, %v957
    %v961 = vld [vmem:[#allocation5] sm:$0xff]
    %v962 = vld [vmem:[#allocation5 + $0x8] sm:$0xff]
    %v963 = vld [vmem:[#allocation5 + $0x10] sm:$0xff]
    %v964 = vld [vmem:[#allocation5 + $0x18] sm:$0xff]
    %s965 = scalar_lea.vmem [#allocation5], 32
    %v966 = vld [vmem:[%s965] sm:$0xff]
    %v967 = vld [vmem:[%s965 + $0x8] sm:$0xff]
    %v968 = vld [vmem:[%s965 + $0x10] sm:$0xff]
    %v969 = vld [vmem:[%s965 + $0x18] sm:$0xff]
    %v973 = vrot.slane %v958, 1
    %v974 = vrot.slane %v959, 1
    %v975 = vsel %vm496, %v973, %v974
    %v976 = vrot.slane %v960, 1
    %v977 = vsel %vm496, %v974, %v976
    %v978 = vsel %vm381, %v975, 0
    %v980 = vsel %vm381, %v977, 0
    %v982 = vsel %vm381, %v976, 0
    %984 = vmatprep.subr.mxu0 0.0
    %985 = vmatpush1.msra.mxu0 %v966
    %986 = vmatprep.subr.mxu0 0.0
    %987 = vmatpush1.msra.mxu0 %v967
    %988 = vmatprep.subr.mxu0 0.0
    %989 = vmatpush1.msra.mxu0 %v968
    %990 = vmatprep.subr.mxu0 0.0
    %991 = vmatpush1.msra.mxu0 %v969
    %992 = vmatprep.subr.mxu0 0.0
    %993 = vmatpush1.msra.mxu0 0.0
    %994 = vmatprep.subr.mxu0 0.0
    %995 = vmatpush1.msra.mxu0 0.0
    %996 = vmatprep.subr.mxu0 0.0
    %997 = vmatpush1.msra.mxu0 0.0
    %998 = vmatprep.subr.mxu0 0.0
    %999 = vmatpush1.msra.mxu0 0.0
    %1000 = vmatprep.subr.mxu0 0.0
    %1001 = vmatpush1.msra.mxu0 0.0
    %1002 = vmatprep.subr.mxu0 0.0
    %1003 = vmatpush1.msra.mxu0 0.0
    %1004 = vmatprep.subr.mxu0 0.0
    %1005 = vmatpush1.msra.mxu0 0.0
    %1006 = vmatprep.subr.mxu0 0.0
    %1007 = vmatpush1.msra.mxu0 0.0
    %1008 = vmatprep.subr.mxu0 0.0
    %1009 = vmatpush1.msra.mxu0 0.0
    %1010 = vmatprep.subr.mxu0 0.0
    %1011 = vmatpush1.msra.mxu0 0.0
    %1012 = vmatprep.subr.mxu0 0.0
    %1013 = vmatpush1.msra.mxu0 0.0
    %1014 = vmatprep.subr.mxu0 0.0
    %1015 = vmatpush1.msra.mxu0 0.0
    %1016 = vmatprep.subr.mxu0 0.0
    %1017 = vmatpush1.msra.mxu0 0.0
    %1018 = vmatprep.subr.mxu0 0.0
    %1019 = vmatpush1.msra.mxu0 0.0
    %1020 = vmatprep.subr.mxu0 0.0
    %1021 = vmatpush1.msra.mxu0 0.0
    %1022 = vmatprep.subr.mxu0 0.0
    %1023 = vmatpush1.msra.mxu0 0.0
    %1024 = vmatprep.subr.mxu0 0.0
    %1025 = vmatpush1.msra.mxu0 0.0
    %1026 = vmatprep.subr.mxu0 0.0
    %1027 = vmatpush1.msra.mxu0 0.0
    %1028 = vmatprep.subr.mxu0 0.0
    %1029 = vmatpush1.msra.mxu0 0.0
    %1030 = vmatprep.subr.mxu0 0.0
    %1031 = vmatpush1.msra.mxu0 0.0
    %1032 = vmatprep.subr.mxu0 0.0
    %1033 = vmatpush1.msra.mxu0 0.0
    %1034 = vmatprep.subr.mxu0 0.0
    %1035 = vmatpush1.msra.mxu0 0.0
    %1036 = vmatprep.subr.mxu0 0.0
    %1037 = vmatpush1.msra.mxu0 0.0
    %1038 = vmatprep.subr.mxu0 0.0
    %1039 = vmatpush1.msra.mxu0 0.0
    %1040 = vmatprep.subr.mxu0 0.0
    %1041 = vmatpush1.msra.mxu0 0.0
    %1042 = vmatprep.subr.mxu0 0.0
    %1043 = vmatpush1.msra.mxu0 0.0
    %1044 = vmatprep.subr.mxu0 0.0
    %1045 = vmatpush1.msra.mxu0 0.0
    %1046 = vmatprep.subr.mxu0 0.0
    %1047 = vmatpush1.msra.mxu0 0.0
    %1048 = vmatprep.mubr.f32.mxu0 0.0
    %1049 = vmatmul.mubr.f32.gmra.mrb[0].mxu0 %v978
    %v1050 = vpop.f32.mrb[0].mxu0
    %v1051 = vadd.f32 0.0, %v1050
    %v1052 = vpop.f32.mrb[0].mxu0
    %1053 = vmatprep.mubr.f32.mxu0 0.0
    %1054 = vmatmul.mubr.f32.gmra.mrb[0].mxu0 %v980
    %v1055 = vpop.f32.mrb[0].mxu0
    %v1056 = vadd.f32 0.0, %v1055
    %v1057 = vpop.f32.mrb[0].mxu0
    %1058 = vmatprep.mubr.f32.mxu0 0.0
    %1059 = vmatmul.mubr.f32.gmra.mrb[0].mxu0 %v982
    %v1060 = vpop.f32.mrb[0].mxu0
    %v1061 = vadd.f32 0.0, %v1060
    %v1062 = vpop.f32.mrb[0].mxu0
    %1063 = vdwg.mxu0
    %v1064 = vsel %vm381, %v958, 0
    %v1066 = vsel %vm381, %v959, 0
    %v1068 = vsel %vm381, %v960, 0
    %1070 = vmatprep.subr.mxu0 0.0
    %1071 = vmatpush1.msra.mxu0 %v961
    %1072 = vmatprep.subr.mxu0 0.0
    %1073 = vmatpush1.msra.mxu0 %v962
    %1074 = vmatprep.subr.mxu0 0.0
    %1075 = vmatpush1.msra.mxu0 %v963
    %1076 = vmatprep.subr.mxu0 0.0
    %1077 = vmatpush1.msra.mxu0 %v964
    %1078 = vmatprep.subr.mxu0 0.0
    %1079 = vmatpush1.msra.mxu0 0.0
    %1080 = vmatprep.subr.mxu0 0.0
    %1081 = vmatpush1.msra.mxu0 0.0
    %1082 = vmatprep.subr.mxu0 0.0
    %1083 = vmatpush1.msra.mxu0 0.0
    %1084 = vmatprep.subr.mxu0 0.0
    %1085 = vmatpush1.msra.mxu0 0.0
    %1086 = vmatprep.subr.mxu0 0.0
    %1087 = vmatpush1.msra.mxu0 0.0
    %1088 = vmatprep.subr.mxu0 0.0
    %1089 = vmatpush1.msra.mxu0 0.0
    %1090 = vmatprep.subr.mxu0 0.0
    %1091 = vmatpush1.msra.mxu0 0.0
    %1092 = vmatprep.subr.mxu0 0.0
    %1093 = vmatpush1.msra.mxu0 0.0
    %1094 = vmatprep.subr.mxu0 0.0
    %1095 = vmatpush1.msra.mxu0 0.0
    %1096 = vmatprep.subr.mxu0 0.0
    %1097 = vmatpush1.msra.mxu0 0.0
    %1098 = vmatprep.subr.mxu0 0.0
    %1099 = vmatpush1.msra.mxu0 0.0
    %1100 = vmatprep.subr.mxu0 0.0
    %1101 = vmatpush1.msra.mxu0 0.0
    %1102 = vmatprep.subr.mxu0 0.0
    %1103 = vmatpush1.msra.mxu0 0.0
    %1104 = vmatprep.subr.mxu0 0.0
    %1105 = vmatpush1.msra.mxu0 0.0
    %1106 = vmatprep.subr.mxu0 0.0
    %1107 = vmatpush1.msra.mxu0 0.0
    %1108 = vmatprep.subr.mxu0 0.0
    %1109 = vmatpush1.msra.mxu0 0.0
    %1110 = vmatprep.subr.mxu0 0.0
    %1111 = vmatpush1.msra.mxu0 0.0
    %1112 = vmatprep.subr.mxu0 0.0
    %1113 = vmatpush1.msra.mxu0 0.0
    %1114 = vmatprep.subr.mxu0 0.0
    %1115 = vmatpush1.msra.mxu0 0.0
    %1116 = vmatprep.subr.mxu0 0.0
    %1117 = vmatpush1.msra.mxu0 0.0
    %1118 = vmatprep.subr.mxu0 0.0
    %1119 = vmatpush1.msra.mxu0 0.0
    %1120 = vmatprep.subr.mxu0 0.0
    %1121 = vmatpush1.msra.mxu0 0.0
    %1122 = vmatprep.subr.mxu0 0.0
    %1123 = vmatpush1.msra.mxu0 0.0
    %1124 = vmatprep.subr.mxu0 0.0
    %1125 = vmatpush1.msra.mxu0 0.0
    %1126 = vmatprep.subr.mxu0 0.0
    %1127 = vmatpush1.msra.mxu0 0.0
    %1128 = vmatprep.subr.mxu0 0.0
    %1129 = vmatpush1.msra.mxu0 0.0
    %1130 = vmatprep.subr.mxu0 0.0
    %1131 = vmatpush1.msra.mxu0 0.0
    %1132 = vmatprep.subr.mxu0 0.0
    %1133 = vmatpush1.msra.mxu0 0.0
    %1134 = vmatprep.mubr.f32.mxu0 0.0
    %1135 = vmatmul.mubr.f32.gmra.mrb[0].mxu0 %v1064
    %v1136 = vpop.f32.mrb[0].mxu0
    %v1137 = vadd.f32 %v1051, %v1136
    %v1138 = vpop.f32.mrb[0].mxu0
    %1139 = vmatprep.mubr.f32.mxu0 0.0
    %1140 = vmatmul.mubr.f32.gmra.mrb[0].mxu0 %v1066
    %v1141 = vpop.f32.mrb[0].mxu0
    %v1142 = vadd.f32 %v1056, %v1141
    %v1143 = vpop.f32.mrb[0].mxu0
    %1144 = vmatprep.mubr.f32.mxu0 0.0
    %1145 = vmatmul.mubr.f32.gmra.mrb[0].mxu0 %v1068
    %v1146 = vpop.f32.mrb[0].mxu0
    %v1147 = vadd.f32 %v1061, %v1146
    %v1148 = vpop.f32.mrb[0].mxu0
    %1149 = vdwg.mxu0
    %s1150 = scalar_lea.vmem [#allocation5], 64
    %v1151 = vld [vmem:[%s1150] sm:$0xff]
    %v1152 = vld [vmem:[%s1150 + $0x8] sm:$0xff]
    %v1153 = vld [vmem:[%s1150 + $0x10] sm:$0xff]
    %v1154 = vld [vmem:[%s1150 + $0x18] sm:$0xff]
    %v1155 = vrot.slane %v958, 2
    %v1156 = vrot.slane %v959, 2
    %v1157 = vsel %vm162, %v1155, %v1156
    %v1158 = vrot.slane %v960, 2
    %v1159 = vsel %vm162, %v1156, %v1158
    %v1160 = vsel %vm381, %v1157, 0
    %v1162 = vsel %vm381, %v1159, 0
    %v1164 = vsel %vm381, %v1158, 0
    %1166 = vmatprep.subr.mxu0 0.0
    %1167 = vmatpush1.msra.mxu0 %v1151
    %1168 = vmatprep.subr.mxu0 0.0
    %1169 = vmatpush1.msra.mxu0 %v1152
    %1170 = vmatprep.subr.mxu0 0.0
    %1171 = vmatpush1.msra.mxu0 %v1153
    %1172 = vmatprep.subr.mxu0 0.0
    %1173 = vmatpush1.msra.mxu0 %v1154
    %1174 = vmatprep.subr.mxu0 0.0
    %1175 = vmatpush1.msra.mxu0 0.0
    %1176 = vmatprep.subr.mxu0 0.0
    %1177 = vmatpush1.msra.mxu0 0.0
    %1178 = vmatprep.subr.mxu0 0.0
    %1179 = vmatpush1.msra.mxu0 0.0
    %1180 = vmatprep.subr.mxu0 0.0
    %1181 = vmatpush1.msra.mxu0 0.0
    %1182 = vmatprep.subr.mxu0 0.0
    %1183 = vmatpush1.msra.mxu0 0.0
    %1184 = vmatprep.subr.mxu0 0.0
    %1185 = vmatpush1.msra.mxu0 0.0
    %1186 = vmatprep.subr.mxu0 0.0
    %1187 = vmatpush1.msra.mxu0 0.0
    %1188 = vmatprep.subr.mxu0 0.0
    %1189 = vmatpush1.msra.mxu0 0.0
    %1190 = vmatprep.subr.mxu0 0.0
    %1191 = vmatpush1.msra.mxu0 0.0
    %1192 = vmatprep.subr.mxu0 0.0
    %1193 = vmatpush1.msra.mxu0 0.0
    %1194 = vmatprep.subr.mxu0 0.0
    %1195 = vmatpush1.msra.mxu0 0.0
    %1196 = vmatprep.subr.mxu0 0.0
    %1197 = vmatpush1.msra.mxu0 0.0
    %1198 = vmatprep.subr.mxu0 0.0
    %1199 = vmatpush1.msra.mxu0 0.0
    %1200 = vmatprep.subr.mxu0 0.0
    %1201 = vmatpush1.msra.mxu0 0.0
    %1202 = vmatprep.subr.mxu0 0.0
    %1203 = vmatpush1.msra.mxu0 0.0
    %1204 = vmatprep.subr.mxu0 0.0
    %1205 = vmatpush1.msra.mxu0 0.0
    %1206 = vmatprep.subr.mxu0 0.0
    %1207 = vmatpush1.msra.mxu0 0.0
    %1208 = vmatprep.subr.mxu0 0.0
    %1209 = vmatpush1.msra.mxu0 0.0
    %1210 = vmatprep.subr.mxu0 0.0
    %1211 = vmatpush1.msra.mxu0 0.0
    %1212 = vmatprep.subr.mxu0 0.0
    %1213 = vmatpush1.msra.mxu0 0.0
    %1214 = vmatprep.subr.mxu0 0.0
    %1215 = vmatpush1.msra.mxu0 0.0
    %1216 = vmatprep.subr.mxu0 0.0
    %1217 = vmatpush1.msra.mxu0 0.0
    %1218 = vmatprep.subr.mxu0 0.0
    %1219 = vmatpush1.msra.mxu0 0.0
    %1220 = vmatprep.subr.mxu0 0.0
    %1221 = vmatpush1.msra.mxu0 0.0
    %1222 = vmatprep.subr.mxu0 0.0
    %1223 = vmatpush1.msra.mxu0 0.0
    %1224 = vmatprep.subr.mxu0 0.0
    %1225 = vmatpush1.msra.mxu0 0.0
    %1226 = vmatprep.subr.mxu0 0.0
    %1227 = vmatpush1.msra.mxu0 0.0
    %1228 = vmatprep.subr.mxu0 0.0
    %1229 = vmatpush1.msra.mxu0 0.0
    %1230 = vmatprep.mubr.f32.mxu0 0.0
    %1231 = vmatmul.mubr.f32.gmra.mrb[0].mxu0 %v1160
    %v1232 = vpop.f32.mrb[0].mxu0
    %v1233 = vadd.f32 0.0, %v1232
    %v1234 = vpop.f32.mrb[0].mxu0
    %1235 = vmatprep.mubr.f32.mxu0 0.0
    %1236 = vmatmul.mubr.f32.gmra.mrb[0].mxu0 %v1162
    %v1237 = vpop.f32.mrb[0].mxu0
    %v1238 = vadd.f32 0.0, %v1237
    %v1239 = vpop.f32.mrb[0].mxu0
    %1240 = vmatprep.mubr.f32.mxu0 0.0
    %1241 = vmatmul.mubr.f32.gmra.mrb[0].mxu0 %v1164
    %v1242 = vpop.f32.mrb[0].mxu0
    %v1243 = vadd.f32 0.0, %v1242
    %v1244 = vpop.f32.mrb[0].mxu0
    %1245 = vdwg.mxu0
    %v1246 = vadd.f32 %v1137, %v1233
    %v1247 = vadd.f32 %v1142, %v1238
    %v1248 = vadd.f32 %v1147, %v1243
    %v1249 = vld [vmem:[%s6] sm:$0x1]
    %v1251 = vlaneseq
    %v1252 = vshrl.u32 %v1251, 7
    %v1253 = vsub.s32 0, %v1252
    %v1254 = vrot.slane %v1249, %v1253
    %v1256 = vadd.f32 %v1246, %v1254
    %v1257 = vadd.f32 %v1247, %v1254
    %v1258 = vadd.f32 %v1248, %v1254
    %v1259 = vmax.f32 %v1256, 0.0
    %v1260 = vmax.f32 %v1257, 0.0
    %v1261 = vmax.f32 %v1258, 0.0
    %1262 = vst.msk [vmem:[#allocation4] sm:$0xff] %vm381, %v1259
    %1263 = vst.msk [vmem:[#allocation4 + $0x8] sm:$0xff] %vm381, %v1260
    %vm1264 = vcmask 256000
    %1265 = vst.msk [vmem:[#allocation4 + $0x10] sm:$0x7] %vm1264, %v1261
    %v1266 = vld [vmem:[#allocation4] ss:$11 sm:$0x3]
    %v1267 = vld [vmem:[%s7] sm:$0xff]
    %v1268 = vld [vmem:[%s7 + $0x8] sm:$0xff]
    %v1269 = vld [vmem:[%s7 + $0x10] sm:$0xff]
    %v1270 = vld [vmem:[%s7 + $0x18] sm:$0xff]
    %s1271 = scalar_lea.vmem [#allocation4], 1
    %v1272 = vld [vmem:[%s1271] ss:$11 sm:$0x3]
    %s1273 = scalar_lea.vmem %s7, 32
    %v1274 = vld [vmem:[%s1273] sm:$0xff]
    %v1275 = vld [vmem:[%s1273 + $0x8] sm:$0xff]
    %v1276 = vld [vmem:[%s1273 + $0x10] sm:$0xff]
    %v1277 = vld [vmem:[%s1273 + $0x18] sm:$0xff]
    %v1279 = vsel %vm381, %v1272, 0
    %1281 = vmatprep.subr.mxu0 0.0
    %1282 = vmatpush1.msra.mxu0 %v1274
    %1283 = vmatprep.subr.mxu0 0.0
    %1284 = vmatpush1.msra.mxu0 %v1275
    %1285 = vmatprep.subr.mxu0 0.0
    %1286 = vmatpush1.msra.mxu0 %v1276
    %1287 = vmatprep.subr.mxu0 0.0
    %1288 = vmatpush1.msra.mxu0 %v1277
    %1289 = vmatprep.subr.mxu0 0.0
    %1290 = vmatpush1.msra.mxu0 0.0
    %1291 = vmatprep.subr.mxu0 0.0
    %1292 = vmatpush1.msra.mxu0 0.0
    %1293 = vmatprep.subr.mxu0 0.0
    %1294 = vmatpush1.msra.mxu0 0.0
    %1295 = vmatprep.subr.mxu0 0.0
    %1296 = vmatpush1.msra.mxu0 0.0
    %1297 = vmatprep.subr.mxu0 0.0
    %1298 = vmatpush1.msra.mxu0 0.0
    %1299 = vmatprep.subr.mxu0 0.0
    %1300 = vmatpush1.msra.mxu0 0.0
    %1301 = vmatprep.subr.mxu0 0.0
    %1302 = vmatpush1.msra.mxu0 0.0
    %1303 = vmatprep.subr.mxu0 0.0
    %1304 = vmatpush1.msra.mxu0 0.0
    %1305 = vmatprep.subr.mxu0 0.0
    %1306 = vmatpush1.msra.mxu0 0.0
    %1307 = vmatprep.subr.mxu0 0.0
    %1308 = vmatpush1.msra.mxu0 0.0
    %1309 = vmatprep.subr.mxu0 0.0
    %1310 = vmatpush1.msra.mxu0 0.0
    %1311 = vmatprep.subr.mxu0 0.0
    %1312 = vmatpush1.msra.mxu0 0.0
    %1313 = vmatprep.subr.mxu0 0.0
    %1314 = vmatpush1.msra.mxu0 0.0
    %1315 = vmatprep.subr.mxu0 0.0
    %1316 = vmatpush1.msra.mxu0 0.0
    %1317 = vmatprep.subr.mxu0 0.0
    %1318 = vmatpush1.msra.mxu0 0.0
    %1319 = vmatprep.subr.mxu0 0.0
    %1320 = vmatpush1.msra.mxu0 0.0
    %1321 = vmatprep.subr.mxu0 0.0
    %1322 = vmatpush1.msra.mxu0 0.0
    %1323 = vmatprep.subr.mxu0 0.0
    %1324 = vmatpush1.msra.mxu0 0.0
    %1325 = vmatprep.subr.mxu0 0.0
    %1326 = vmatpush1.msra.mxu0 0.0
    %1327 = vmatprep.subr.mxu0 0.0
    %1328 = vmatpush1.msra.mxu0 0.0
    %1329 = vmatprep.subr.mxu0 0.0
    %1330 = vmatpush1.msra.mxu0 0.0
    %1331 = vmatprep.subr.mxu0 0.0
    %1332 = vmatpush1.msra.mxu0 0.0
    %1333 = vmatprep.subr.mxu0 0.0
    %1334 = vmatpush1.msra.mxu0 0.0
    %1335 = vmatprep.subr.mxu0 0.0
    %1336 = vmatpush1.msra.mxu0 0.0
    %1337 = vmatprep.subr.mxu0 0.0
    %1338 = vmatpush1.msra.mxu0 0.0
    %1339 = vmatprep.subr.mxu0 0.0
    %1340 = vmatpush1.msra.mxu0 0.0
    %1341 = vmatprep.subr.mxu0 0.0
    %1342 = vmatpush1.msra.mxu0 0.0
    %1343 = vmatprep.subr.mxu0 0.0
    %1344 = vmatpush1.msra.mxu0 0.0
    %1345 = vmatprep.mubr.f32.mxu0 0.0
    %1346 = vmatmul.mubr.f32.gmra.mrb[0].mxu0 %v1279
    %v1347 = vpop.f32.mrb[0].mxu0
    %v1348 = vadd.f32 0.0, %v1347
    %v1349 = vpop.f32.mrb[0].mxu0
    %1350 = vdwg.mxu0
    %v1352 = vsel %vm381, %v1266, 0
    %1354 = vmatprep.subr.mxu0 0.0
    %1355 = vmatpush1.msra.mxu0 %v1267
    %1356 = vmatprep.subr.mxu0 0.0
    %1357 = vmatpush1.msra.mxu0 %v1268
    %1358 = vmatprep.subr.mxu0 0.0
    %1359 = vmatpush1.msra.mxu0 %v1269
    %1360 = vmatprep.subr.mxu0 0.0
    %1361 = vmatpush1.msra.mxu0 %v1270
    %1362 = vmatprep.subr.mxu0 0.0
    %1363 = vmatpush1.msra.mxu0 0.0
    %1364 = vmatprep.subr.mxu0 0.0
    %1365 = vmatpush1.msra.mxu0 0.0
    %1366 = vmatprep.subr.mxu0 0.0
    %1367 = vmatpush1.msra.mxu0 0.0
    %1368 = vmatprep.subr.mxu0 0.0
    %1369 = vmatpush1.msra.mxu0 0.0
    %1370 = vmatprep.subr.mxu0 0.0
    %1371 = vmatpush1.msra.mxu0 0.0
    %1372 = vmatprep.subr.mxu0 0.0
    %1373 = vmatpush1.msra.mxu0 0.0
    %1374 = vmatprep.subr.mxu0 0.0
    %1375 = vmatpush1.msra.mxu0 0.0
    %1376 = vmatprep.subr.mxu0 0.0
    %1377 = vmatpush1.msra.mxu0 0.0
    %1378 = vmatprep.subr.mxu0 0.0
    %1379 = vmatpush1.msra.mxu0 0.0
    %1380 = vmatprep.subr.mxu0 0.0
    %1381 = vmatpush1.msra.mxu0 0.0
    %1382 = vmatprep.subr.mxu0 0.0
    %1383 = vmatpush1.msra.mxu0 0.0
    %1384 = vmatprep.subr.mxu0 0.0
    %1385 = vmatpush1.msra.mxu0 0.0
    %1386 = vmatprep.subr.mxu0 0.0
    %1387 = vmatpush1.msra.mxu0 0.0
    %1388 = vmatprep.subr.mxu0 0.0
    %1389 = vmatpush1.msra.mxu0 0.0
    %1390 = vmatprep.subr.mxu0 0.0
    %1391 = vmatpush1.msra.mxu0 0.0
    %1392 = vmatprep.subr.mxu0 0.0
    %1393 = vmatpush1.msra.mxu0 0.0
    %1394 = vmatprep.subr.mxu0 0.0
    %1395 = vmatpush1.msra.mxu0 0.0
    %1396 = vmatprep.subr.mxu0 0.0
    %1397 = vmatpush1.msra.mxu0 0.0
    %1398 = vmatprep.subr.mxu0 0.0
    %1399 = vmatpush1.msra.mxu0 0.0
    %1400 = vmatprep.subr.mxu0 0.0
    %1401 = vmatpush1.msra.mxu0 0.0
    %1402 = vmatprep.subr.mxu0 0.0
    %1403 = vmatpush1.msra.mxu0 0.0
    %1404 = vmatprep.subr.mxu0 0.0
    %1405 = vmatpush1.msra.mxu0 0.0
    %1406 = vmatprep.subr.mxu0 0.0
    %1407 = vmatpush1.msra.mxu0 0.0
    %1408 = vmatprep.subr.mxu0 0.0
    %1409 = vmatpush1.msra.mxu0 0.0
    %1410 = vmatprep.subr.mxu0 0.0
    %1411 = vmatpush1.msra.mxu0 0.0
    %1412 = vmatprep.subr.mxu0 0.0
    %1413 = vmatpush1.msra.mxu0 0.0
    %1414 = vmatprep.subr.mxu0 0.0
    %1415 = vmatpush1.msra.mxu0 0.0
    %1416 = vmatprep.subr.mxu0 0.0
    %1417 = vmatpush1.msra.mxu0 0.0
    %1418 = vmatprep.mubr.f32.mxu0 0.0
    %1419 = vmatmul.mubr.f32.gmra.mrb[0].mxu0 %v1352
    %v1420 = vpop.f32.mrb[0].mxu0
    %v1421 = vadd.f32 %v1348, %v1420
    %v1422 = vpop.f32.mrb[0].mxu0
    %1423 = vdwg.mxu0
    %s1424 = scalar_lea.vmem [#allocation4], 2
    %v1425 = vld [vmem:[%s1424] ss:$11 sm:$0x3]
    %s1426 = scalar_lea.vmem %s7, 64
    %v1427 = vld [vmem:[%s1426] sm:$0xff]
    %v1428 = vld [vmem:[%s1426 + $0x8] sm:$0xff]
    %v1429 = vld [vmem:[%s1426 + $0x10] sm:$0xff]
    %v1430 = vld [vmem:[%s1426 + $0x18] sm:$0xff]
    %v1432 = vsel %vm381, %v1425, 0
    %1434 = vmatprep.subr.mxu0 0.0
    %1435 = vmatpush1.msra.mxu0 %v1427
    %1436 = vmatprep.subr.mxu0 0.0
    %1437 = vmatpush1.msra.mxu0 %v1428
    %1438 = vmatprep.subr.mxu0 0.0
    %1439 = vmatpush1.msra.mxu0 %v1429
    %1440 = vmatprep.subr.mxu0 0.0
    %1441 = vmatpush1.msra.mxu0 %v1430
    %1442 = vmatprep.subr.mxu0 0.0
    %1443 = vmatpush1.msra.mxu0 0.0
    %1444 = vmatprep.subr.mxu0 0.0
    %1445 = vmatpush1.msra.mxu0 0.0
    %1446 = vmatprep.subr.mxu0 0.0
    %1447 = vmatpush1.msra.mxu0 0.0
    %1448 = vmatprep.subr.mxu0 0.0
    %1449 = vmatpush1.msra.mxu0 0.0
    %1450 = vmatprep.subr.mxu0 0.0
    %1451 = vmatpush1.msra.mxu0 0.0
    %1452 = vmatprep.subr.mxu0 0.0
    %1453 = vmatpush1.msra.mxu0 0.0
    %1454 = vmatprep.subr.mxu0 0.0
    %1455 = vmatpush1.msra.mxu0 0.0
    %1456 = vmatprep.subr.mxu0 0.0
    %1457 = vmatpush1.msra.mxu0 0.0
    %1458 = vmatprep.subr.mxu0 0.0
    %1459 = vmatpush1.msra.mxu0 0.0
    %1460 = vmatprep.subr.mxu0 0.0
    %1461 = vmatpush1.msra.mxu0 0.0
    %1462 = vmatprep.subr.mxu0 0.0
    %1463 = vmatpush1.msra.mxu0 0.0
    %1464 = vmatprep.subr.mxu0 0.0
    %1465 = vmatpush1.msra.mxu0 0.0
    %1466 = vmatprep.subr.mxu0 0.0
    %1467 = vmatpush1.msra.mxu0 0.0
    %1468 = vmatprep.subr.mxu0 0.0
    %1469 = vmatpush1.msra.mxu0 0.0
    %1470 = vmatprep.subr.mxu0 0.0
    %1471 = vmatpush1.msra.mxu0 0.0
    %1472 = vmatprep.subr.mxu0 0.0
    %1473 = vmatpush1.msra.mxu0 0.0
    %1474 = vmatprep.subr.mxu0 0.0
    %1475 = vmatpush1.msra.mxu0 0.0
    %1476 = vmatprep.subr.mxu0 0.0
    %1477 = vmatpush1.msra.mxu0 0.0
    %1478 = vmatprep.subr.mxu0 0.0
    %1479 = vmatpush1.msra.mxu0 0.0
    %1480 = vmatprep.subr.mxu0 0.0
    %1481 = vmatpush1.msra.mxu0 0.0
    %1482 = vmatprep.subr.mxu0 0.0
    %1483 = vmatpush1.msra.mxu0 0.0
    %1484 = vmatprep.subr.mxu0 0.0
    %1485 = vmatpush1.msra.mxu0 0.0
    %1486 = vmatprep.subr.mxu0 0.0
    %1487 = vmatpush1.msra.mxu0 0.0
    %1488 = vmatprep.subr.mxu0 0.0
    %1489 = vmatpush1.msra.mxu0 0.0
    %1490 = vmatprep.subr.mxu0 0.0
    %1491 = vmatpush1.msra.mxu0 0.0
    %1492 = vmatprep.subr.mxu0 0.0
    %1493 = vmatpush1.msra.mxu0 0.0
    %1494 = vmatprep.subr.mxu0 0.0
    %1495 = vmatpush1.msra.mxu0 0.0
    %1496 = vmatprep.subr.mxu0 0.0
    %1497 = vmatpush1.msra.mxu0 0.0
    %1498 = vmatprep.mubr.f32.mxu0 0.0
    %1499 = vmatmul.mubr.f32.gmra.mrb[0].mxu0 %v1432
    %v1500 = vpop.f32.mrb[0].mxu0
    %v1501 = vadd.f32 0.0, %v1500
    %v1502 = vpop.f32.mrb[0].mxu0
    %1503 = vdwg.mxu0
    %v1504 = vadd.f32 %v1421, %v1501
    %s1505 = scalar_lea.vmem [#allocation4], 3
    %v1506 = vld [vmem:[%s1505] ss:$11 sm:$0x3]
    %s1507 = scalar_lea.vmem %s7, 96
    %v1508 = vld [vmem:[%s1507] sm:$0xff]
    %v1509 = vld [vmem:[%s1507 + $0x8] sm:$0xff]
    %v1510 = vld [vmem:[%s1507 + $0x10] sm:$0xff]
    %v1511 = vld [vmem:[%s1507 + $0x18] sm:$0xff]
    %v1513 = vsel %vm381, %v1506, 0
    %1515 = vmatprep.subr.mxu0 0.0
    %1516 = vmatpush1.msra.mxu0 %v1508
    %1517 = vmatprep.subr.mxu0 0.0
    %1518 = vmatpush1.msra.mxu0 %v1509
    %1519 = vmatprep.subr.mxu0 0.0
    %1520 = vmatpush1.msra.mxu0 %v1510
    %1521 = vmatprep.subr.mxu0 0.0
    %1522 = vmatpush1.msra.mxu0 %v1511
    %1523 = vmatprep.subr.mxu0 0.0
    %1524 = vmatpush1.msra.mxu0 0.0
    %1525 = vmatprep.subr.mxu0 0.0
    %1526 = vmatpush1.msra.mxu0 0.0
    %1527 = vmatprep.subr.mxu0 0.0
    %1528 = vmatpush1.msra.mxu0 0.0
    %1529 = vmatprep.subr.mxu0 0.0
    %1530 = vmatpush1.msra.mxu0 0.0
    %1531 = vmatprep.subr.mxu0 0.0
    %1532 = vmatpush1.msra.mxu0 0.0
    %1533 = vmatprep.subr.mxu0 0.0
    %1534 = vmatpush1.msra.mxu0 0.0
    %1535 = vmatprep.subr.mxu0 0.0
    %1536 = vmatpush1.msra.mxu0 0.0
    %1537 = vmatprep.subr.mxu0 0.0
    %1538 = vmatpush1.msra.mxu0 0.0
    %1539 = vmatprep.subr.mxu0 0.0
    %1540 = vmatpush1.msra.mxu0 0.0
    %1541 = vmatprep.subr.mxu0 0.0
    %1542 = vmatpush1.msra.mxu0 0.0
    %1543 = vmatprep.subr.mxu0 0.0
    %1544 = vmatpush1.msra.mxu0 0.0
    %1545 = vmatprep.subr.mxu0 0.0
    %1546 = vmatpush1.msra.mxu0 0.0
    %1547 = vmatprep.subr.mxu0 0.0
    %1548 = vmatpush1.msra.mxu0 0.0
    %1549 = vmatprep.subr.mxu0 0.0
    %1550 = vmatpush1.msra.mxu0 0.0
    %1551 = vmatprep.subr.mxu0 0.0
    %1552 = vmatpush1.msra.mxu0 0.0
    %1553 = vmatprep.subr.mxu0 0.0
    %1554 = vmatpush1.msra.mxu0 0.0
    %1555 = vmatprep.subr.mxu0 0.0
    %1556 = vmatpush1.msra.mxu0 0.0
    %1557 = vmatprep.subr.mxu0 0.0
    %1558 = vmatpush1.msra.mxu0 0.0
    %1559 = vmatprep.subr.mxu0 0.0
    %1560 = vmatpush1.msra.mxu0 0.0
    %1561 = vmatprep.subr.mxu0 0.0
    %1562 = vmatpush1.msra.mxu0 0.0
    %1563 = vmatprep.subr.mxu0 0.0
    %1564 = vmatpush1.msra.mxu0 0.0
    %1565 = vmatprep.subr.mxu0 0.0
    %1566 = vmatpush1.msra.mxu0 0.0
    %1567 = vmatprep.subr.mxu0 0.0
    %1568 = vmatpush1.msra.mxu0 0.0
    %1569 = vmatprep.subr.mxu0 0.0
    %1570 = vmatpush1.msra.mxu0 0.0
    %1571 = vmatprep.subr.mxu0 0.0
    %1572 = vmatpush1.msra.mxu0 0.0
    %1573 = vmatprep.subr.mxu0 0.0
    %1574 = vmatpush1.msra.mxu0 0.0
    %1575 = vmatprep.subr.mxu0 0.0
    %1576 = vmatpush1.msra.mxu0 0.0
    %1577 = vmatprep.subr.mxu0 0.0
    %1578 = vmatpush1.msra.mxu0 0.0
    %1579 = vmatprep.mubr.f32.mxu0 0.0
    %1580 = vmatmul.mubr.f32.gmra.mrb[0].mxu0 %v1513
    %v1581 = vpop.f32.mrb[0].mxu0
    %v1582 = vadd.f32 0.0, %v1581
    %v1583 = vpop.f32.mrb[0].mxu0
    %1584 = vdwg.mxu0
    %v1585 = vadd.f32 %v1504, %v1582
    %s1586 = scalar_lea.vmem [#allocation4], 4
    %v1587 = vld [vmem:[%s1586] ss:$11 sm:$0x3]
    %s1588 = scalar_lea.vmem %s7, 128
    %v1589 = vld [vmem:[%s1588] sm:$0xff]
    %v1590 = vld [vmem:[%s1588 + $0x8] sm:$0xff]
    %v1591 = vld [vmem:[%s1588 + $0x10] sm:$0xff]
    %v1592 = vld [vmem:[%s1588 + $0x18] sm:$0xff]
    %v1594 = vsel %vm381, %v1587, 0
    %1596 = vmatprep.subr.mxu0 0.0
    %1597 = vmatpush1.msra.mxu0 %v1589
    %1598 = vmatprep.subr.mxu0 0.0
    %1599 = vmatpush1.msra.mxu0 %v1590
    %1600 = vmatprep.subr.mxu0 0.0
    %1601 = vmatpush1.msra.mxu0 %v1591
    %1602 = vmatprep.subr.mxu0 0.0
    %1603 = vmatpush1.msra.mxu0 %v1592
    %1604 = vmatprep.subr.mxu0 0.0
    %1605 = vmatpush1.msra.mxu0 0.0
    %1606 = vmatprep.subr.mxu0 0.0
    %1607 = vmatpush1.msra.mxu0 0.0
    %1608 = vmatprep.subr.mxu0 0.0
    %1609 = vmatpush1.msra.mxu0 0.0
    %1610 = vmatprep.subr.mxu0 0.0
    %1611 = vmatpush1.msra.mxu0 0.0
    %1612 = vmatprep.subr.mxu0 0.0
    %1613 = vmatpush1.msra.mxu0 0.0
    %1614 = vmatprep.subr.mxu0 0.0
    %1615 = vmatpush1.msra.mxu0 0.0
    %1616 = vmatprep.subr.mxu0 0.0
    %1617 = vmatpush1.msra.mxu0 0.0
    %1618 = vmatprep.subr.mxu0 0.0
    %1619 = vmatpush1.msra.mxu0 0.0
    %1620 = vmatprep.subr.mxu0 0.0
    %1621 = vmatpush1.msra.mxu0 0.0
    %1622 = vmatprep.subr.mxu0 0.0
    %1623 = vmatpush1.msra.mxu0 0.0
    %1624 = vmatprep.subr.mxu0 0.0
    %1625 = vmatpush1.msra.mxu0 0.0
    %1626 = vmatprep.subr.mxu0 0.0
    %1627 = vmatpush1.msra.mxu0 0.0
    %1628 = vmatprep.subr.mxu0 0.0
    %1629 = vmatpush1.msra.mxu0 0.0
    %1630 = vmatprep.subr.mxu0 0.0
    %1631 = vmatpush1.msra.mxu0 0.0
    %1632 = vmatprep.subr.mxu0 0.0
    %1633 = vmatpush1.msra.mxu0 0.0
    %1634 = vmatprep.subr.mxu0 0.0
    %1635 = vmatpush1.msra.mxu0 0.0
    %1636 = vmatprep.subr.mxu0 0.0
    %1637 = vmatpush1.msra.mxu0 0.0
    %1638 = vmatprep.subr.mxu0 0.0
    %1639 = vmatpush1.msra.mxu0 0.0
    %1640 = vmatprep.subr.mxu0 0.0
    %1641 = vmatpush1.msra.mxu0 0.0
    %1642 = vmatprep.subr.mxu0 0.0
    %1643 = vmatpush1.msra.mxu0 0.0
    %1644 = vmatprep.subr.mxu0 0.0
    %1645 = vmatpush1.msra.mxu0 0.0
    %1646 = vmatprep.subr.mxu0 0.0
    %1647 = vmatpush1.msra.mxu0 0.0
    %1648 = vmatprep.subr.mxu0 0.0
    %1649 = vmatpush1.msra.mxu0 0.0
    %1650 = vmatprep.subr.mxu0 0.0
    %1651 = vmatpush1.msra.mxu0 0.0
    %1652 = vmatprep.subr.mxu0 0.0
    %1653 = vmatpush1.msra.mxu0 0.0
    %1654 = vmatprep.subr.mxu0 0.0
    %1655 = vmatpush1.msra.mxu0 0.0
    %1656 = vmatprep.subr.mxu0 0.0
    %1657 = vmatpush1.msra.mxu0 0.0
    %1658 = vmatprep.subr.mxu0 0.0
    %1659 = vmatpush1.msra.mxu0 0.0
    %1660 = vmatprep.mubr.f32.mxu0 0.0
    %1661 = vmatmul.mubr.f32.gmra.mrb[0].mxu0 %v1594
    %v1662 = vpop.f32.mrb[0].mxu0
    %v1663 = vadd.f32 0.0, %v1662
    %v1664 = vpop.f32.mrb[0].mxu0
    %1665 = vdwg.mxu0
    %v1666 = vadd.f32 %v1585, %v1663
    %s1667 = scalar_lea.vmem [#allocation4], 5
    %v1668 = vld [vmem:[%s1667] ss:$11 sm:$0x3]
    %s1669 = scalar_lea.vmem %s7, 160
    %v1670 = vld [vmem:[%s1669] sm:$0xff]
    %v1671 = vld [vmem:[%s1669 + $0x8] sm:$0xff]
    %v1672 = vld [vmem:[%s1669 + $0x10] sm:$0xff]
    %v1673 = vld [vmem:[%s1669 + $0x18] sm:$0xff]
    %v1675 = vsel %vm381, %v1668, 0
    %1677 = vmatprep.subr.mxu0 0.0
    %1678 = vmatpush1.msra.mxu0 %v1670
    %1679 = vmatprep.subr.mxu0 0.0
    %1680 = vmatpush1.msra.mxu0 %v1671
    %1681 = vmatprep.subr.mxu0 0.0
    %1682 = vmatpush1.msra.mxu0 %v1672
    %1683 = vmatprep.subr.mxu0 0.0
    %1684 = vmatpush1.msra.mxu0 %v1673
    %1685 = vmatprep.subr.mxu0 0.0
    %1686 = vmatpush1.msra.mxu0 0.0
    %1687 = vmatprep.subr.mxu0 0.0
    %1688 = vmatpush1.msra.mxu0 0.0
    %1689 = vmatprep.subr.mxu0 0.0
    %1690 = vmatpush1.msra.mxu0 0.0
    %1691 = vmatprep.subr.mxu0 0.0
    %1692 = vmatpush1.msra.mxu0 0.0
    %1693 = vmatprep.subr.mxu0 0.0
    %1694 = vmatpush1.msra.mxu0 0.0
    %1695 = vmatprep.subr.mxu0 0.0
    %1696 = vmatpush1.msra.mxu0 0.0
    %1697 = vmatprep.subr.mxu0 0.0
    %1698 = vmatpush1.msra.mxu0 0.0
    %1699 = vmatprep.subr.mxu0 0.0
    %1700 = vmatpush1.msra.mxu0 0.0
    %1701 = vmatprep.subr.mxu0 0.0
    %1702 = vmatpush1.msra.mxu0 0.0
    %1703 = vmatprep.subr.mxu0 0.0
    %1704 = vmatpush1.msra.mxu0 0.0
    %1705 = vmatprep.subr.mxu0 0.0
    %1706 = vmatpush1.msra.mxu0 0.0
    %1707 = vmatprep.subr.mxu0 0.0
    %1708 = vmatpush1.msra.mxu0 0.0
    %1709 = vmatprep.subr.mxu0 0.0
    %1710 = vmatpush1.msra.mxu0 0.0
    %1711 = vmatprep.subr.mxu0 0.0
    %1712 = vmatpush1.msra.mxu0 0.0
    %1713 = vmatprep.subr.mxu0 0.0
    %1714 = vmatpush1.msra.mxu0 0.0
    %1715 = vmatprep.subr.mxu0 0.0
    %1716 = vmatpush1.msra.mxu0 0.0
    %1717 = vmatprep.subr.mxu0 0.0
    %1718 = vmatpush1.msra.mxu0 0.0
    %1719 = vmatprep.subr.mxu0 0.0
    %1720 = vmatpush1.msra.mxu0 0.0
    %1721 = vmatprep.subr.mxu0 0.0
    %1722 = vmatpush1.msra.mxu0 0.0
    %1723 = vmatprep.subr.mxu0 0.0
    %1724 = vmatpush1.msra.mxu0 0.0
    %1725 = vmatprep.subr.mxu0 0.0
    %1726 = vmatpush1.msra.mxu0 0.0
    %1727 = vmatprep.subr.mxu0 0.0
    %1728 = vmatpush1.msra.mxu0 0.0
    %1729 = vmatprep.subr.mxu0 0.0
    %1730 = vmatpush1.msra.mxu0 0.0
    %1731 = vmatprep.subr.mxu0 0.0
    %1732 = vmatpush1.msra.mxu0 0.0
    %1733 = vmatprep.subr.mxu0 0.0
    %1734 = vmatpush1.msra.mxu0 0.0
    %1735 = vmatprep.subr.mxu0 0.0
    %1736 = vmatpush1.msra.mxu0 0.0
    %1737 = vmatprep.subr.mxu0 0.0
    %1738 = vmatpush1.msra.mxu0 0.0
    %1739 = vmatprep.subr.mxu0 0.0
    %1740 = vmatpush1.msra.mxu0 0.0
    %1741 = vmatprep.mubr.f32.mxu0 0.0
    %1742 = vmatmul.mubr.f32.gmra.mrb[0].mxu0 %v1675
    %v1743 = vpop.f32.mrb[0].mxu0
    %v1744 = vadd.f32 0.0, %v1743
    %v1745 = vpop.f32.mrb[0].mxu0
    %1746 = vdwg.mxu0
    %v1747 = vadd.f32 %v1666, %v1744
    %s1748 = scalar_lea.vmem [#allocation4], 6
    %v1749 = vld [vmem:[%s1748] ss:$11 sm:$0x3]
    %s1750 = scalar_lea.vmem %s7, 192
    %v1751 = vld [vmem:[%s1750] sm:$0xff]
    %v1752 = vld [vmem:[%s1750 + $0x8] sm:$0xff]
    %v1753 = vld [vmem:[%s1750 + $0x10] sm:$0xff]
    %v1754 = vld [vmem:[%s1750 + $0x18] sm:$0xff]
    %v1756 = vsel %vm381, %v1749, 0
    %1758 = vmatprep.subr.mxu0 0.0
    %1759 = vmatpush1.msra.mxu0 %v1751
    %1760 = vmatprep.subr.mxu0 0.0
    %1761 = vmatpush1.msra.mxu0 %v1752
    %1762 = vmatprep.subr.mxu0 0.0
    %1763 = vmatpush1.msra.mxu0 %v1753
    %1764 = vmatprep.subr.mxu0 0.0
    %1765 = vmatpush1.msra.mxu0 %v1754
    %1766 = vmatprep.subr.mxu0 0.0
    %1767 = vmatpush1.msra.mxu0 0.0
    %1768 = vmatprep.subr.mxu0 0.0
    %1769 = vmatpush1.msra.mxu0 0.0
    %1770 = vmatprep.subr.mxu0 0.0
    %1771 = vmatpush1.msra.mxu0 0.0
    %1772 = vmatprep.subr.mxu0 0.0
    %1773 = vmatpush1.msra.mxu0 0.0
    %1774 = vmatprep.subr.mxu0 0.0
    %1775 = vmatpush1.msra.mxu0 0.0
    %1776 = vmatprep.subr.mxu0 0.0
    %1777 = vmatpush1.msra.mxu0 0.0
    %1778 = vmatprep.subr.mxu0 0.0
    %1779 = vmatpush1.msra.mxu0 0.0
    %1780 = vmatprep.subr.mxu0 0.0
    %1781 = vmatpush1.msra.mxu0 0.0
    %1782 = vmatprep.subr.mxu0 0.0
    %1783 = vmatpush1.msra.mxu0 0.0
    %1784 = vmatprep.subr.mxu0 0.0
    %1785 = vmatpush1.msra.mxu0 0.0
    %1786 = vmatprep.subr.mxu0 0.0
    %1787 = vmatpush1.msra.mxu0 0.0
    %1788 = vmatprep.subr.mxu0 0.0
    %1789 = vmatpush1.msra.mxu0 0.0
    %1790 = vmatprep.subr.mxu0 0.0
    %1791 = vmatpush1.msra.mxu0 0.0
    %1792 = vmatprep.subr.mxu0 0.0
    %1793 = vmatpush1.msra.mxu0 0.0
    %1794 = vmatprep.subr.mxu0 0.0
    %1795 = vmatpush1.msra.mxu0 0.0
    %1796 = vmatprep.subr.mxu0 0.0
    %1797 = vmatpush1.msra.mxu0 0.0
    %1798 = vmatprep.subr.mxu0 0.0
    %1799 = vmatpush1.msra.mxu0 0.0
    %1800 = vmatprep.subr.mxu0 0.0
    %1801 = vmatpush1.msra.mxu0 0.0
    %1802 = vmatprep.subr.mxu0 0.0
    %1803 = vmatpush1.msra.mxu0 0.0
    %1804 = vmatprep.subr.mxu0 0.0
    %1805 = vmatpush1.msra.mxu0 0.0
    %1806 = vmatprep.subr.mxu0 0.0
    %1807 = vmatpush1.msra.mxu0 0.0
    %1808 = vmatprep.subr.mxu0 0.0
    %1809 = vmatpush1.msra.mxu0 0.0
    %1810 = vmatprep.subr.mxu0 0.0
    %1811 = vmatpush1.msra.mxu0 0.0
    %1812 = vmatprep.subr.mxu0 0.0
    %1813 = vmatpush1.msra.mxu0 0.0
    %1814 = vmatprep.subr.mxu0 0.0
    %1815 = vmatpush1.msra.mxu0 0.0
    %1816 = vmatprep.subr.mxu0 0.0
    %1817 = vmatpush1.msra.mxu0 0.0
    %1818 = vmatprep.subr.mxu0 0.0
    %1819 = vmatpush1.msra.mxu0 0.0
    %1820 = vmatprep.subr.mxu0 0.0
    %1821 = vmatpush1.msra.mxu0 0.0
    %1822 = vmatprep.mubr.f32.mxu0 0.0
    %1823 = vmatmul.mubr.f32.gmra.mrb[0].mxu0 %v1756
    %v1824 = vpop.f32.mrb[0].mxu0
    %v1825 = vadd.f32 0.0, %v1824
    %v1826 = vpop.f32.mrb[0].mxu0
    %1827 = vdwg.mxu0
    %v1828 = vadd.f32 %v1747, %v1825
    %s1829 = scalar_lea.vmem [#allocation4], 7
    %v1830 = vld [vmem:[%s1829] ss:$11 sm:$0x3]
    %s1831 = scalar_lea.vmem %s7, 224
    %v1832 = vld [vmem:[%s1831] sm:$0xff]
    %v1833 = vld [vmem:[%s1831 + $0x8] sm:$0xff]
    %v1834 = vld [vmem:[%s1831 + $0x10] sm:$0xff]
    %v1835 = vld [vmem:[%s1831 + $0x18] sm:$0xff]
    %v1837 = vsel %vm381, %v1830, 0
    %1839 = vmatprep.subr.mxu0 0.0
    %1840 = vmatpush1.msra.mxu0 %v1832
    %1841 = vmatprep.subr.mxu0 0.0
    %1842 = vmatpush1.msra.mxu0 %v1833
    %1843 = vmatprep.subr.mxu0 0.0
    %1844 = vmatpush1.msra.mxu0 %v1834
    %1845 = vmatprep.subr.mxu0 0.0
    %1846 = vmatpush1.msra.mxu0 %v1835
    %1847 = vmatprep.subr.mxu0 0.0
    %1848 = vmatpush1.msra.mxu0 0.0
    %1849 = vmatprep.subr.mxu0 0.0
    %1850 = vmatpush1.msra.mxu0 0.0
    %1851 = vmatprep.subr.mxu0 0.0
    %1852 = vmatpush1.msra.mxu0 0.0
    %1853 = vmatprep.subr.mxu0 0.0
    %1854 = vmatpush1.msra.mxu0 0.0
    %1855 = vmatprep.subr.mxu0 0.0
    %1856 = vmatpush1.msra.mxu0 0.0
    %1857 = vmatprep.subr.mxu0 0.0
    %1858 = vmatpush1.msra.mxu0 0.0
    %1859 = vmatprep.subr.mxu0 0.0
    %1860 = vmatpush1.msra.mxu0 0.0
    %1861 = vmatprep.subr.mxu0 0.0
    %1862 = vmatpush1.msra.mxu0 0.0
    %1863 = vmatprep.subr.mxu0 0.0
    %1864 = vmatpush1.msra.mxu0 0.0
    %1865 = vmatprep.subr.mxu0 0.0
    %1866 = vmatpush1.msra.mxu0 0.0
    %1867 = vmatprep.subr.mxu0 0.0
    %1868 = vmatpush1.msra.mxu0 0.0
    %1869 = vmatprep.subr.mxu0 0.0
    %1870 = vmatpush1.msra.mxu0 0.0
    %1871 = vmatprep.subr.mxu0 0.0
    %1872 = vmatpush1.msra.mxu0 0.0
    %1873 = vmatprep.subr.mxu0 0.0
    %1874 = vmatpush1.msra.mxu0 0.0
    %1875 = vmatprep.subr.mxu0 0.0
    %1876 = vmatpush1.msra.mxu0 0.0
    %1877 = vmatprep.subr.mxu0 0.0
    %1878 = vmatpush1.msra.mxu0 0.0
    %1879 = vmatprep.subr.mxu0 0.0
    %1880 = vmatpush1.msra.mxu0 0.0
    %1881 = vmatprep.subr.mxu0 0.0
    %1882 = vmatpush1.msra.mxu0 0.0
    %1883 = vmatprep.subr.mxu0 0.0
    %1884 = vmatpush1.msra.mxu0 0.0
    %1885 = vmatprep.subr.mxu0 0.0
    %1886 = vmatpush1.msra.mxu0 0.0
    %1887 = vmatprep.subr.mxu0 0.0
    %1888 = vmatpush1.msra.mxu0 0.0
    %1889 = vmatprep.subr.mxu0 0.0
    %1890 = vmatpush1.msra.mxu0 0.0
    %1891 = vmatprep.subr.mxu0 0.0
    %1892 = vmatpush1.msra.mxu0 0.0
    %1893 = vmatprep.subr.mxu0 0.0
    %1894 = vmatpush1.msra.mxu0 0.0
    %1895 = vmatprep.subr.mxu0 0.0
    %1896 = vmatpush1.msra.mxu0 0.0
    %1897 = vmatprep.subr.mxu0 0.0
    %1898 = vmatpush1.msra.mxu0 0.0
    %1899 = vmatprep.subr.mxu0 0.0
    %1900 = vmatpush1.msra.mxu0 0.0
    %1901 = vmatprep.subr.mxu0 0.0
    %1902 = vmatpush1.msra.mxu0 0.0
    %1903 = vmatprep.mubr.f32.mxu0 0.0
    %1904 = vmatmul.mubr.f32.gmra.mrb[0].mxu0 %v1837
    %v1905 = vpop.f32.mrb[0].mxu0
    %v1906 = vadd.f32 0.0, %v1905
    %v1907 = vpop.f32.mrb[0].mxu0
    %1908 = vdwg.mxu0
    %v1909 = vadd.f32 %v1828, %v1906
    %v1910 = vld [vmem:[%s8] sm:$0x1]
    %v1912 = vlaneseq
    %v1913 = vshrl.u32 %v1912, 7
    %v1914 = vsub.s32 0, %v1913
    %v1915 = vrot.slane %v1910, %v1914
    %v1917 = vadd.f32 %v1909, %v1915
    %v1918 = vld [vmem:[%s9] sm:$0xff]
    %v1919 = vld [vmem:[%s9 + $0x8] sm:$0xff]
    %v1920 = vld [vmem:[%s9 + $0x10] sm:$0xff]
    %v1921 = vld [vmem:[%s9 + $0x18] sm:$0xff]
    %v1922 = vld [vmem:[%s9 + $0x20] sm:$0xff]
    %v1923 = vld [vmem:[%s9 + $0x28] sm:$0xff]
    %v1924 = vld [vmem:[%s9 + $0x30] sm:$0xff]
    %v1925 = vld [vmem:[%s9 + $0x38] sm:$0xff]
    %v1926 = vld [vmem:[%s9 + $0x40] sm:$0xff]
    %v1927 = vld [vmem:[%s9 + $0x48] sm:$0xff]
    %v1928 = vld [vmem:[%s9 + $0x50] sm:$0xff]
    %v1929 = vld [vmem:[%s9 + $0x58] sm:$0xff]
    %v1930 = vld [vmem:[%s9 + $0x60] sm:$0xff]
    %v1931 = vld [vmem:[%s9 + $0x68] sm:$0xff]
    %v1932 = vld [vmem:[%s9 + $0x70] sm:$0xff]
    %v1933 = vld [vmem:[%s9 + $0x78] sm:$0xff]
    %v1934 = vld [vmem:[%s10] sm:$0x1]
    %v1936 = vlaneseq
    %v1937 = vshrl.u32 %v1936, 7
    %v1938 = vsub.s32 0, %v1937
    %v1939 = vrot.slane %v1934, %v1938
    %1941 = vmatprep.subr.mxu0 0.0
    %1942 = vmatpush1.msra.mxu0 %v1918
    %1943 = vmatprep.subr.mxu0 0.0
    %1944 = vmatpush1.msra.mxu0 %v1919
    %1945 = vmatprep.subr.mxu0 0.0
    %1946 = vmatpush1.msra.mxu0 %v1920
    %1947 = vmatprep.subr.mxu0 0.0
    %1948 = vmatpush1.msra.mxu0 %v1921
    %1949 = vmatprep.subr.mxu0 0.0
    %1950 = vmatpush1.msra.mxu0 %v1922
    %1951 = vmatprep.subr.mxu0 0.0
    %1952 = vmatpush1.msra.mxu0 %v1923
    %1953 = vmatprep.subr.mxu0 0.0
    %1954 = vmatpush1.msra.mxu0 %v1924
    %1955 = vmatprep.subr.mxu0 0.0
    %1956 = vmatpush1.msra.mxu0 %v1925
    %1957 = vmatprep.subr.mxu0 0.0
    %1958 = vmatpush1.msra.mxu0 %v1926
    %1959 = vmatprep.subr.mxu0 0.0
    %1960 = vmatpush1.msra.mxu0 %v1927
    %1961 = vmatprep.subr.mxu0 0.0
    %1962 = vmatpush1.msra.mxu0 %v1928
    %1963 = vmatprep.subr.mxu0 0.0
    %1964 = vmatpush1.msra.mxu0 %v1929
    %1965 = vmatprep.subr.mxu0 0.0
    %1966 = vmatpush1.msra.mxu0 %v1930
    %1967 = vmatprep.subr.mxu0 0.0
    %1968 = vmatpush1.msra.mxu0 %v1931
    %1969 = vmatprep.subr.mxu0 0.0
    %1970 = vmatpush1.msra.mxu0 %v1932
    %1971 = vmatprep.subr.mxu0 0.0
    %1972 = vmatpush1.msra.mxu0 %v1933
    %1973 = vmatprep.subr.mxu0 0.0
    %1974 = vmatpush1.msra.mxu0 0.0
    %1975 = vmatprep.subr.mxu0 0.0
    %1976 = vmatpush1.msra.mxu0 0.0
    %1977 = vmatprep.subr.mxu0 0.0
    %1978 = vmatpush1.msra.mxu0 0.0
    %1979 = vmatprep.subr.mxu0 0.0
    %1980 = vmatpush1.msra.mxu0 0.0
    %1981 = vmatprep.subr.mxu0 0.0
    %1982 = vmatpush1.msra.mxu0 0.0
    %1983 = vmatprep.subr.mxu0 0.0
    %1984 = vmatpush1.msra.mxu0 0.0
    %1985 = vmatprep.subr.mxu0 0.0
    %1986 = vmatpush1.msra.mxu0 0.0
    %1987 = vmatprep.subr.mxu0 0.0
    %1988 = vmatpush1.msra.mxu0 0.0
    %1989 = vmatprep.subr.mxu0 0.0
    %1990 = vmatpush1.msra.mxu0 0.0
    %1991 = vmatprep.subr.mxu0 0.0
    %1992 = vmatpush1.msra.mxu0 0.0
    %1993 = vmatprep.subr.mxu0 0.0
    %1994 = vmatpush1.msra.mxu0 0.0
    %1995 = vmatprep.subr.mxu0 0.0
    %1996 = vmatpush1.msra.mxu0 0.0
    %1997 = vmatprep.subr.mxu0 0.0
    %1998 = vmatpush1.msra.mxu0 0.0
    %1999 = vmatprep.subr.mxu0 0.0
    %2000 = vmatpush1.msra.mxu0 0.0
    %2001 = vmatprep.subr.mxu0 0.0
    %2002 = vmatpush1.msra.mxu0 0.0
    %2003 = vmatprep.subr.mxu0 0.0
    %2004 = vmatpush1.msra.mxu0 0.0
    %2005 = vmatprep.mubr.f32.mxu0 0.0
    %2006 = vmatmul.mubr.f32.gmra.mrb[0].mxu0 %v1917
    %v2007 = vpop.f32.mrb[0].mxu0
    %v2008 = vadd.f32 %v1939, %v2007
    %v2009 = vpop.f32.mrb[0].mxu0
    %2010 = vdwg.mxu0
    %vm2011 = vcmask 58368
    %2012 = vst.msk [vmem:[#allocation8] sm:$0x3] %vm2011, %v2008
    // Predicated region
    $region50: #{tpu_custom_call.1} parent=1 // pred_check
      _
    $region51: #{tpu_custom_call.1} parent=1 // pred_check_branch
      %2014 = sbr.rel (0) target = $region53
    $region52: #{tpu_custom_call.1} parent=1 // pred_region
      %s2016 = ssub.s32 32, 32
      %2017 = vsyncadd [#allocation7], %s2016
      %s2019 = sshll.u32 [#allocation8], 4
      %s2020 = int_to_ptr.vmem [resolvable:$true] %s2019
      %2022 = dma.vmem_to_hbm [thread:$0]  %s2020, 32, %s11, [#allocation7]
    $region53: #{tpu_custom_call.1} parent=1 // pred_fallthru
      _
    // Predicated region
    $region54: #{tpu_custom_call.1} parent=1 // pred_check
      _
    $region55: #{tpu_custom_call.1} parent=1 // pred_check_branch
      %2024 = sbr.rel (0) target = $region57
    $region56: #{tpu_custom_call.1} parent=1 // pred_region
      %2025 = dma.done [#allocation7], 32
    $region57: #{tpu_custom_call.1} parent=1 // pred_fallthru
      _
    %2026 = vsyncpa [#allocation6], 1
    %2027 = vsyncpa [#allocation7], 1

</llo_original>
